<compile_context>
chip_gen: v7x
topology: tpu7x:2x2x1
jax: 0.10.0
libtpu: 0.0.40
codegen_flags: <defaults>
</compile_context>

<pallas_src>
import functools
import math

import numpy as np

import jax
import jax.numpy as jnp
from jax import lax
from jax.experimental import pallas as pl
from jax.experimental.pallas import tpu as pltpu


# ----------------------------- Pallas kernel --------------------------------
def _msdwconv_kernel(x_ref, w_ref, b_ref, o_ref, *, H, W, K, c_blk, kb_ranges):
    """One (batch, channel-block) tile, NHWC with C on the lane axis.

    x_ref : (1, H+2P, W+2P, c_blk)  VMEM, zero-padded halo (P = K//2)
    w_ref : (1, K, K, c_blk)        VMEM, per-channel taps, zero-embedded and
                                    centered inside the K x K grid
    b_ref : (1, 1, c_blk)           VMEM, per-channel bias
    o_ref : (1, H, W, c_blk)        VMEM, lane-dense output
    """
    cb = pl.program_id(1)

    def run_branch(kb):
        # All channels of this block have kernel size <= kb; taps outside the
        # central kb x kb window of the K x K grid are zero for every channel,
        # so they are statically skipped.
        g0 = (K - kb) // 2
        # Accumulator init = broadcast bias (saves one full-tile VALU add);
        # hoisted out of the row loop (broadcast_in_dim is not CSE'd by JAX).
        bias_row = jnp.broadcast_to(
            b_ref[...].astype(jnp.float32), (1, W, c_blk))

        @pl.loop(0, H)
        def _(h):
            acc = bias_row
            for kh in range(kb):
                for kw in range(kb):
                    # Shifted window read straight from the VMEM ref:
                    # dynamic offset only on the untiled H dim, static sublane
                    # offset on W, full 128 lanes on C.  No XLU work.
                    win = x_ref[0, pl.ds(h + g0 + kh, 1),
                                pl.ds(g0 + kw, W), :].astype(jnp.float32)
                    wv = w_ref[0, g0 + kh, g0 + kw, :].astype(jnp.float32)
                    acc = acc + win * wv
            o_ref[0, pl.ds(h, 1)] = acc.astype(o_ref.dtype)

    if len(kb_ranges) == 1:
        run_branch(kb_ranges[0][0])
    else:
        # Static dispatch: blocks are contiguous per kb value, so exactly one
        # branch body executes per grid step.
        for kb, lo, hi in kb_ranges:
            pl.when(jnp.logical_and(cb >= lo, cb < hi))(
                functools.partial(run_branch, kb))


@functools.partial(jax.jit, static_argnames=("kb_ranges",))
def _multiscale_dwconv(x_nchw, w_tab, b_tab, *, kb_ranges):
    """x_nchw: (N, C, H, W); w_tab: (n_blk, K, K, c_blk) f32;
    b_tab: (n_blk, 1, c_blk) f32."""
    N, C, H, W = x_nchw.shape
    n_blk, K, _, c_blk = w_tab.shape
    P = K // 2
    C_pad = n_blk * c_blk
    Hp, Wp = H + 2 * P, W + 2 * P

    # NCHW -> NHWC + conv halo + channel pad, one fused copy under jit.
    # Kernel correctness relies on the halo values being exactly zero.
    x_nhwc = jnp.transpose(x_nchw, (0, 2, 3, 1))
    x_pad = jnp.pad(x_nhwc, ((0, 0), (P, P), (P, P), (0, C_pad - C)))

    flops = 0
    for kb, lo, hi in kb_ranges:
        flops += 2 * N * H * W * (hi - lo) * c_blk * kb * kb
    bytes_accessed = int(
        x_pad.size * x_pad.dtype.itemsize
        + w_tab.size * w_tab.dtype.itemsize
        + b_tab.size * b_tab.dtype.itemsize
        + N * H * W * C_pad * x_nchw.dtype.itemsize)

    kernel = functools.partial(_msdwconv_kernel, H=H, W=W, K=K,
                               c_blk=c_blk, kb_ranges=kb_ranges)

    # v7x megacore balance: the channel-block axis is branch-ordered (and thus
    # load-imbalanced), so when N is even force the core split onto batch.
    dim_sem = ("parallel", "arbitrary") if N % 2 == 0 else ("parallel", "parallel")

    out_nhwc = pl.pallas_call(
        kernel,
        out_shape=jax.ShapeDtypeStruct((N, H, W, C_pad), x_nchw.dtype),
        grid=(N, n_blk),
        in_specs=[
            pl.BlockSpec((1, Hp, Wp, c_blk), lambda n, cb: (n, 0, 0, cb)),
            pl.BlockSpec((1, K, K, c_blk), lambda n, cb: (cb, 0, 0, 0)),
            pl.BlockSpec((1, 1, c_blk), lambda n, cb: (cb, 0, 0)),
        ],
        out_specs=pl.BlockSpec((1, H, W, c_blk), lambda n, cb: (n, 0, 0, cb)),
        compiler_params=pltpu.CompilerParams(
            dimension_semantics=dim_sem,
            vmem_limit_bytes=32 * 1024 * 1024),
        cost_estimate=pl.CostEstimate(
            flops=flops, transcendentals=0, bytes_accessed=bytes_accessed),
    )(x_pad, w_tab, b_tab)

    # Crop channel padding and go back to NCHW (fuses with the consumer).
    return jnp.transpose(out_nhwc[..., :C], (0, 3, 1, 2))


# --------------------------- Module-level wrapper ----------------------------
class MultiScaleDWConvPallas:
    """JAX/Pallas port of transxnet MultiScaleDWConv (NCHW in, NCHW out)."""

    def __init__(self, dim, scale=(1, 3, 5, 7), key=None):
        self.dim = dim
        self.scale = tuple(scale)
        for k in self.scale:
            assert k % 2 == 1, "only odd kernel sizes give 'same' output size"
        n = len(self.scale)
        channels = []
        for i in range(n):
            if i == 0:
                channels.append(dim - dim // n * (n - 1))
            else:
                channels.append(dim // n)
        assert sum(channels) == dim
        self.channels = tuple(channels)

        K = max(self.scale)
        self.K = K

        # Lane-block size: 128 channels on the lane axis (full vreg width) for
        # production dims; for tiny dims use the full channel count (the lane
        # dim then equals the full array dim, which Mosaic accepts).
        if dim >= 128:
            c_blk = 128
            C_pad = (dim + 127) // 128 * 128
        else:
            c_blk = dim
            C_pad = dim
        self.c_blk = c_blk
        self.C_pad = C_pad
        n_blk = C_pad // c_blk

        # Per-channel kernel size (branch order); padding channels get k=1.
        chan_k = []
        for k, ch in zip(self.scale, self.channels):
            chan_k += [k] * ch
        chan_k += [1] * (C_pad - dim)
        # Per channel-block: max kernel size present -> contiguous kb ranges.
        blk_k = [max(chan_k[b * c_blk:(b + 1) * c_blk]) for b in range(n_blk)]
        kb_ranges = []
        b = 0
        while b < n_blk:
            e = b
            while e < n_blk and blk_k[e] == blk_k[b]:
                e += 1
            kb_ranges.append((blk_k[b], b, e))
            b = e
        self.kb_ranges = tuple(kb_ranges)

        if key is None:
            key = jax.random.PRNGKey(0)

        # Build the zero-embedded, centered weight/bias tables (lane-major).
        w_tab = np.zeros((n_blk, K, K, c_blk), np.float32)
        b_tab = np.zeros((n_blk, 1, c_blk), np.float32)
        self._branch_params = []
        c_off = 0
        for k, ch in zip(self.scale, self.channels):
            key, kw_key, kb_key = jax.random.split(key, 3)
            fan_in = k * k                       # depthwise: in_ch/groups == 1
            bound = 1.0 / math.sqrt(fan_in)
            w = jax.random.uniform(kw_key, (ch, 1, k, k), jnp.float32,
                                   minval=-bound, maxval=bound)
            b = jax.random.uniform(kb_key, (ch,), jnp.float32,
                                   minval=-bound, maxval=bound)
            self._branch_params.append((w, b))
            off = (K - k) // 2
            w_np = np.asarray(w)[:, 0]           # (ch, k, k)
            b_np = np.asarray(b)
            for ci in range(ch):
                c = c_off + ci
                w_tab[c // c_blk, off:off + k, off:off + k, c % c_blk] = w_np[ci]
                b_tab[c // c_blk, 0, c % c_blk] = b_np[ci]
            c_off += ch
        self.w_tab = jnp.asarray(w_tab)
        self.b_tab = jnp.asarray(b_tab)

    def __call__(self, x_nchw):
        return _multiscale_dwconv(x_nchw, self.w_tab, self.b_tab,
                                  kb_ranges=self.kb_ranges)

    def reference(self, x_nchw):
        """Pure-JAX reference mirroring the PyTorch forward (split/conv/cat)."""
        outs = []
        c_off = 0
        for (k, ch), (w, b) in zip(zip(self.scale, self.channels),
                                   self._branch_params):
            feat = x_nchw[:, c_off:c_off + ch]
            y = lax.conv_general_dilated(
                feat, w,
                window_strides=(1, 1),
                padding=[(k // 2, k // 2), (k // 2, k // 2)],
                dimension_numbers=("NCHW", "OIHW", "NCHW"),
                feature_group_count=ch,
                precision=lax.Precision.HIGHEST)
            outs.append(y + b.reshape(1, ch, 1, 1))
            c_off += ch
        return jnp.concatenate(outs, axis=1)


if __name__ == "__main__":
    key = jax.random.PRNGKey(0)

    # Primary test: the spec shape (single channel block, kb = 7 path).
    key, xkey, pkey = jax.random.split(key, 3)
    N, C, H, W = 2, 4, 16, 16          # dim=4 with scale (1,3,5,7) -> (1,1,1,1)
    x = jax.random.normal(xkey, (N, C, H, W), jnp.float32)
    module = MultiScaleDWConvPallas(dim=C, scale=(1, 3, 5, 7), key=pkey)
    y = jax.block_until_ready(module(x))
    y_ref = jax.block_until_ready(module.reference(x))
    assert y.shape == (N, C, H, W)
    err = float(jnp.max(jnp.abs(y - y_ref)))
    assert jnp.allclose(y, y_ref, atol=1e-4, rtol=1e-4), err

    # Secondary test: multiple 128-channel lane blocks exercising the
    # per-block kb dispatch (blocks with kb=3 and kb=7).
    key, xkey2, pkey2 = jax.random.split(key, 3)
    N2, C2, H2, W2 = 1, 256, 8, 8
    x2 = jax.random.normal(xkey2, (N2, C2, H2, W2), jnp.float32)
    module2 = MultiScaleDWConvPallas(dim=C2, scale=(1, 3, 5, 7), key=pkey2)
    y2 = jax.block_until_ready(module2(x2))
    y2_ref = jax.block_until_ready(module2.reference(x2))
    assert y2.shape == (N2, C2, H2, W2)
    err2 = float(jnp.max(jnp.abs(y2 - y2_ref)))
    assert jnp.allclose(y2, y2_ref, atol=1e-4, rtol=1e-4), err2

    print("KERNEL_OK")
</pallas_src>

<mosaic_0001>
module attributes {stable_mosaic.version = 11 : i64} {
  func.func @_msdwconv_kernel(%arg0: i32, %arg1: i32, %arg2: memref<1x22x22x4xf32, #tpu.memory_space<vmem>>, %arg3: memref<1x7x7x4xf32, #tpu.memory_space<vmem>>, %arg4: memref<1x1x4xf32, #tpu.memory_space<vmem>>, %arg5: memref<1x16x16x4xf32, #tpu.memory_space<vmem>>) attributes {dimension_semantics = [#tpu.dimension_semantics<parallel>, #tpu.dimension_semantics<arbitrary>], iteration_bounds = array<i64: 2, 1>, scalar_prefetch = 0 : i64, scratch_operands = 0 : i64, tpu.core_type = #tpu.core_type<tc>, window_params = [{transform_indices = @transform_0, window_bounds = array<i64: 1, 22, 22, 4>}, {transform_indices = @transform_1, window_bounds = array<i64: 1, 7, 7, 4>}, {transform_indices = @transform_2, window_bounds = array<i64: 1, 1, 4>}, {transform_indices = @transform_3, window_bounds = array<i64: 1, 16, 16, 4>}]} {
    %c0 = arith.constant 0 : index
    %c0_0 = arith.constant 0 : index
    %c0_1 = arith.constant 0 : index
    %0 = vector.load %arg4[%c0, %c0_0, %c0_1] : memref<1x1x4xf32, #tpu.memory_space<vmem>>, vector<1x1x4xf32>
    %1 = vector.shape_cast %0 : vector<1x1x4xf32> to vector<1x1x4xf32>
    %2 = vector.broadcast %1 : vector<1x1x4xf32> to vector<1x16x4xf32>
    %c0_i32 = arith.constant 0 : i32
    %c16_i32 = arith.constant 16 : i32
    %3 = arith.addi %c0_i32, %c16_i32 : i32
    %c1_i32 = arith.constant 1 : i32
    scf.for %arg6 = %c0_i32 to %3 step %c1_i32  : i32 {
      %c1_i32_3 = arith.constant 1 : i32
      %4 = arith.muli %arg6, %c1_i32_3 : i32
      %c0_i32_4 = arith.constant 0 : i32
      %5 = arith.addi %c0_i32_4, %4 : i32
      %c0_i32_5 = arith.constant 0 : i32
      %6 = arith.addi %5, %c0_i32_5 : i32
      %c0_i32_6 = arith.constant 0 : i32
      %7 = arith.addi %6, %c0_i32_6 : i32
      %c0_7 = arith.constant 0 : index
      %8 = arith.index_cast %7 : i32 to index
      %c0_8 = arith.constant 0 : index
      %c0_9 = arith.constant 0 : index
      %9 = vector.load %arg2[%c0_7, %8, %c0_8, %c0_9] : memref<1x22x22x4xf32, #tpu.memory_space<vmem>>, vector<1x1x16x4xf32>
      %10 = vector.shape_cast %9 : vector<1x1x16x4xf32> to vector<1x16x4xf32>
      %c0_10 = arith.constant 0 : index
      %c0_11 = arith.constant 0 : index
      %c0_12 = arith.constant 0 : index
      %c0_13 = arith.constant 0 : index
      %11 = vector.load %arg3[%c0_10, %c0_11, %c0_12, %c0_13] : memref<1x7x7x4xf32, #tpu.memory_space<vmem>>, vector<1x1x1x4xf32>
      %12 = vector.shape_cast %11 : vector<1x1x1x4xf32> to vector<4xf32>
      %13 = vector.shape_cast %12 : vector<4xf32> to vector<1x1x4xf32>
      %14 = vector.broadcast %13 : vector<1x1x4xf32> to vector<1x16x4xf32>
      %15 = arith.mulf %10, %14 : vector<1x16x4xf32>
      %16 = arith.addf %2, %15 : vector<1x16x4xf32>
      %c0_i32_14 = arith.constant 0 : i32
      %17 = arith.addi %5, %c0_i32_14 : i32
      %c0_i32_15 = arith.constant 0 : i32
      %18 = arith.addi %17, %c0_i32_15 : i32
      %c0_16 = arith.constant 0 : index
      %19 = arith.index_cast %18 : i32 to index
      %c1 = arith.constant 1 : index
      %c0_17 = arith.constant 0 : index
      %20 = vector.load %arg2[%c0_16, %19, %c1, %c0_17] : memref<1x22x22x4xf32, #tpu.memory_space<vmem>>, vector<1x1x16x4xf32>
      %21 = vector.shape_cast %20 : vector<1x1x16x4xf32> to vector<1x16x4xf32>
      %c0_18 = arith.constant 0 : index
      %c0_19 = arith.constant 0 : index
      %c1_20 = arith.constant 1 : index
      %c0_21 = arith.constant 0 : index
      %22 = vector.load %arg3[%c0_18, %c0_19, %c1_20, %c0_21] : memref<1x7x7x4xf32, #tpu.memory_space<vmem>>, vector<1x1x1x4xf32>
      %23 = vector.shape_cast %22 : vector<1x1x1x4xf32> to vector<4xf32>
      %24 = vector.shape_cast %23 : vector<4xf32> to vector<1x1x4xf32>
      %25 = vector.broadcast %24 : vector<1x1x4xf32> to vector<1x16x4xf32>
      %26 = arith.mulf %21, %25 : vector<1x16x4xf32>
      %27 = arith.addf %16, %26 : vector<1x16x4xf32>
      %c0_i32_22 = arith.constant 0 : i32
      %28 = arith.addi %5, %c0_i32_22 : i32
      %c0_i32_23 = arith.constant 0 : i32
      %29 = arith.addi %28, %c0_i32_23 : i32
      %c0_24 = arith.constant 0 : index
      %30 = arith.index_cast %29 : i32 to index
      %c2 = arith.constant 2 : index
      %c0_25 = arith.constant 0 : index
      %31 = vector.load %arg2[%c0_24, %30, %c2, %c0_25] : memref<1x22x22x4xf32, #tpu.memory_space<vmem>>, vector<1x1x16x4xf32>
      %32 = vector.shape_cast %31 : vector<1x1x16x4xf32> to vector<1x16x4xf32>
      %c0_26 = arith.constant 0 : index
      %c0_27 = arith.constant 0 : index
      %c2_28 = arith.constant 2 : index
      %c0_29 = arith.constant 0 : index
      %33 = vector.load %arg3[%c0_26, %c0_27, %c2_28, %c0_29] : memref<1x7x7x4xf32, #tpu.memory_space<vmem>>, vector<1x1x1x4xf32>
      %34 = vector.shape_cast %33 : vector<1x1x1x4xf32> to vector<4xf32>
      %35 = vector.shape_cast %34 : vector<4xf32> to vector<1x1x4xf32>
      %36 = vector.broadcast %35 : vector<1x1x4xf32> to vector<1x16x4xf32>
      %37 = arith.mulf %32, %36 : vector<1x16x4xf32>
      %38 = arith.addf %27, %37 : vector<1x16x4xf32>
      %c0_i32_30 = arith.constant 0 : i32
      %39 = arith.addi %5, %c0_i32_30 : i32
      %c0_i32_31 = arith.constant 0 : i32
      %40 = arith.addi %39, %c0_i32_31 : i32
      %c0_32 = arith.constant 0 : index
      %41 = arith.index_cast %40 : i32 to index
      %c3 = arith.constant 3 : index
      %c0_33 = arith.constant 0 : index
      %42 = vector.load %arg2[%c0_32, %41, %c3, %c0_33] : memref<1x22x22x4xf32, #tpu.memory_space<vmem>>, vector<1x1x16x4xf32>
      %43 = vector.shape_cast %42 : vector<1x1x16x4xf32> to vector<1x16x4xf32>
      %c0_34 = arith.constant 0 : index
      %c0_35 = arith.constant 0 : index
      %c3_36 = arith.constant 3 : index
      %c0_37 = arith.constant 0 : index
      %44 = vector.load %arg3[%c0_34, %c0_35, %c3_36, %c0_37] : memref<1x7x7x4xf32, #tpu.memory_space<vmem>>, vector<1x1x1x4xf32>
      %45 = vector.shape_cast %44 : vector<1x1x1x4xf32> to vector<4xf32>
      %46 = vector.shape_cast %45 : vector<4xf32> to vector<1x1x4xf32>
      %47 = vector.broadcast %46 : vector<1x1x4xf32> to vector<1x16x4xf32>
      %48 = arith.mulf %43, %47 : vector<1x16x4xf32>
      %49 = arith.addf %38, %48 : vector<1x16x4xf32>
      %c0_i32_38 = arith.constant 0 : i32
      %50 = arith.addi %5, %c0_i32_38 : i32
      %c0_i32_39 = arith.constant 0 : i32
      %51 = arith.addi %50, %c0_i32_39 : i32
      %c0_40 = arith.constant 0 : index
      %52 = arith.index_cast %51 : i32 to index
      %c4 = arith.constant 4 : index
      %c0_41 = arith.constant 0 : index
      %53 = vector.load %arg2[%c0_40, %52, %c4, %c0_41] : memref<1x22x22x4xf32, #tpu.memory_space<vmem>>, vector<1x1x16x4xf32>
      %54 = vector.shape_cast %53 : vector<1x1x16x4xf32> to vector<1x16x4xf32>
      %c0_42 = arith.constant 0 : index
      %c0_43 = arith.constant 0 : index
      %c4_44 = arith.constant 4 : index
      %c0_45 = arith.constant 0 : index
      %55 = vector.load %arg3[%c0_42, %c0_43, %c4_44, %c0_45] : memref<1x7x7x4xf32, #tpu.memory_space<vmem>>, vector<1x1x1x4xf32>
      %56 = vector.shape_cast %55 : vector<1x1x1x4xf32> to vector<4xf32>
      %57 = vector.shape_cast %56 : vector<4xf32> to vector<1x1x4xf32>
      %58 = vector.broadcast %57 : vector<1x1x4xf32> to vector<1x16x4xf32>
      %59 = arith.mulf %54, %58 : vector<1x16x4xf32>
      %60 = arith.addf %49, %59 : vector<1x16x4xf32>
      %c0_i32_46 = arith.constant 0 : i32
      %61 = arith.addi %5, %c0_i32_46 : i32
      %c0_i32_47 = arith.constant 0 : i32
      %62 = arith.addi %61, %c0_i32_47 : i32
      %c0_48 = arith.constant 0 : index
      %63 = arith.index_cast %62 : i32 to index
      %c5 = arith.constant 5 : index
      %c0_49 = arith.constant 0 : index
      %64 = vector.load %arg2[%c0_48, %63, %c5, %c0_49] : memref<1x22x22x4xf32, #tpu.memory_space<vmem>>, vector<1x1x16x4xf32>
      %65 = vector.shape_cast %64 : vector<1x1x16x4xf32> to vector<1x16x4xf32>
      %c0_50 = arith.constant 0 : index
      %c0_51 = arith.constant 0 : index
      %c5_52 = arith.constant 5 : index
      %c0_53 = arith.constant 0 : index
      %66 = vector.load %arg3[%c0_50, %c0_51, %c5_52, %c0_53] : memref<1x7x7x4xf32, #tpu.memory_space<vmem>>, vector<1x1x1x4xf32>
      %67 = vector.shape_cast %66 : vector<1x1x1x4xf32> to vector<4xf32>
      %68 = vector.shape_cast %67 : vector<4xf32> to vector<1x1x4xf32>
      %69 = vector.broadcast %68 : vector<1x1x4xf32> to vector<1x16x4xf32>
      %70 = arith.mulf %65, %69 : vector<1x16x4xf32>
      %71 = arith.addf %60, %70 : vector<1x16x4xf32>
      %c0_i32_54 = arith.constant 0 : i32
      %72 = arith.addi %5, %c0_i32_54 : i32
      %c0_i32_55 = arith.constant 0 : i32
      %73 = arith.addi %72, %c0_i32_55 : i32
      %c0_56 = arith.constant 0 : index
      %74 = arith.index_cast %73 : i32 to index
      %c6 = arith.constant 6 : index
      %c0_57 = arith.constant 0 : index
      %75 = vector.load %arg2[%c0_56, %74, %c6, %c0_57] : memref<1x22x22x4xf32, #tpu.memory_space<vmem>>, vector<1x1x16x4xf32>
      %76 = vector.shape_cast %75 : vector<1x1x16x4xf32> to vector<1x16x4xf32>
      %c0_58 = arith.constant 0 : index
      %c0_59 = arith.constant 0 : index
      %c6_60 = arith.constant 6 : index
      %c0_61 = arith.constant 0 : index
      %77 = vector.load %arg3[%c0_58, %c0_59, %c6_60, %c0_61] : memref<1x7x7x4xf32, #tpu.memory_space<vmem>>, vector<1x1x1x4xf32>
      %78 = vector.shape_cast %77 : vector<1x1x1x4xf32> to vector<4xf32>
      %79 = vector.shape_cast %78 : vector<4xf32> to vector<1x1x4xf32>
      %80 = vector.broadcast %79 : vector<1x1x4xf32> to vector<1x16x4xf32>
      %81 = arith.mulf %76, %80 : vector<1x16x4xf32>
      %82 = arith.addf %71, %81 : vector<1x16x4xf32>
      %c0_i32_62 = arith.constant 0 : i32
      %83 = arith.addi %5, %c0_i32_62 : i32
      %c1_i32_63 = arith.constant 1 : i32
      %84 = arith.addi %83, %c1_i32_63 : i32
      %c0_64 = arith.constant 0 : index
      %85 = arith.index_cast %84 : i32 to index
      %c0_65 = arith.constant 0 : index
      %c0_66 = arith.constant 0 : index
      %86 = vector.load %arg2[%c0_64, %85, %c0_65, %c0_66] : memref<1x22x22x4xf32, #tpu.memory_space<vmem>>, vector<1x1x16x4xf32>
      %87 = vector.shape_cast %86 : vector<1x1x16x4xf32> to vector<1x16x4xf32>
      %c0_67 = arith.constant 0 : index
      %c1_68 = arith.constant 1 : index
      %c0_69 = arith.constant 0 : index
      %c0_70 = arith.constant 0 : index
      %88 = vector.load %arg3[%c0_67, %c1_68, %c0_69, %c0_70] : memref<1x7x7x4xf32, #tpu.memory_space<vmem>>, vector<1x1x1x4xf32>
      %89 = vector.shape_cast %88 : vector<1x1x1x4xf32> to vector<4xf32>
      %90 = vector.shape_cast %89 : vector<4xf32> to vector<1x1x4xf32>
      %91 = vector.broadcast %90 : vector<1x1x4xf32> to vector<1x16x4xf32>
      %92 = arith.mulf %87, %91 : vector<1x16x4xf32>
      %93 = arith.addf %82, %92 : vector<1x16x4xf32>
      %c0_i32_71 = arith.constant 0 : i32
      %94 = arith.addi %5, %c0_i32_71 : i32
      %c1_i32_72 = arith.constant 1 : i32
      %95 = arith.addi %94, %c1_i32_72 : i32
      %c0_73 = arith.constant 0 : index
      %96 = arith.index_cast %95 : i32 to index
      %c1_74 = arith.constant 1 : index
      %c0_75 = arith.constant 0 : index
      %97 = vector.load %arg2[%c0_73, %96, %c1_74, %c0_75] : memref<1x22x22x4xf32, #tpu.memory_space<vmem>>, vector<1x1x16x4xf32>
      %98 = vector.shape_cast %97 : vector<1x1x16x4xf32> to vector<1x16x4xf32>
      %c0_76 = arith.constant 0 : index
      %c1_77 = arith.constant 1 : index
      %c1_78 = arith.constant 1 : index
      %c0_79 = arith.constant 0 : index
      %99 = vector.load %arg3[%c0_76, %c1_77, %c1_78, %c0_79] : memref<1x7x7x4xf32, #tpu.memory_space<vmem>>, vector<1x1x1x4xf32>
      %100 = vector.shape_cast %99 : vector<1x1x1x4xf32> to vector<4xf32>
      %101 = vector.shape_cast %100 : vector<4xf32> to vector<1x1x4xf32>
      %102 = vector.broadcast %101 : vector<1x1x4xf32> to vector<1x16x4xf32>
      %103 = arith.mulf %98, %102 : vector<1x16x4xf32>
      %104 = arith.addf %93, %103 : vector<1x16x4xf32>
      %c0_i32_80 = arith.constant 0 : i32
      %105 = arith.addi %5, %c0_i32_80 : i32
      %c1_i32_81 = arith.constant 1 : i32
      %106 = arith.addi %105, %c1_i32_81 : i32
      %c0_82 = arith.constant 0 : index
      %107 = arith.index_cast %106 : i32 to index
      %c2_83 = arith.constant 2 : index
      %c0_84 = arith.constant 0 : index
      %108 = vector.load %arg2[%c0_82, %107, %c2_83, %c0_84] : memref<1x22x22x4xf32, #tpu.memory_space<vmem>>, vector<1x1x16x4xf32>
      %109 = vector.shape_cast %108 : vector<1x1x16x4xf32> to vector<1x16x4xf32>
      %c0_85 = arith.constant 0 : index
      %c1_86 = arith.constant 1 : index
      %c2_87 = arith.constant 2 : index
      %c0_88 = arith.constant 0 : index
      %110 = vector.load %arg3[%c0_85, %c1_86, %c2_87, %c0_88] : memref<1x7x7x4xf32, #tpu.memory_space<vmem>>, vector<1x1x1x4xf32>
      %111 = vector.shape_cast %110 : vector<1x1x1x4xf32> to vector<4xf32>
      %112 = vector.shape_cast %111 : vector<4xf32> to vector<1x1x4xf32>
      %113 = vector.broadcast %112 : vector<1x1x4xf32> to vector<1x16x4xf32>
      %114 = arith.mulf %109, %113 : vector<1x16x4xf32>
      %115 = arith.addf %104, %114 : vector<1x16x4xf32>
      %c0_i32_89 = arith.constant 0 : i32
      %116 = arith.addi %5, %c0_i32_89 : i32
      %c1_i32_90 = arith.constant 1 : i32
      %117 = arith.addi %116, %c1_i32_90 : i32
      %c0_91 = arith.constant 0 : index
      %118 = arith.index_cast %117 : i32 to index
      %c3_92 = arith.constant 3 : index
      %c0_93 = arith.constant 0 : index
      %119 = vector.load %arg2[%c0_91, %118, %c3_92, %c0_93] : memref<1x22x22x4xf32, #tpu.memory_space<vmem>>, vector<1x1x16x4xf32>
      %120 = vector.shape_cast %119 : vector<1x1x16x4xf32> to vector<1x16x4xf32>
      %c0_94 = arith.constant 0 : index
      %c1_95 = arith.constant 1 : index
      %c3_96 = arith.constant 3 : index
      %c0_97 = arith.constant 0 : index
      %121 = vector.load %arg3[%c0_94, %c1_95, %c3_96, %c0_97] : memref<1x7x7x4xf32, #tpu.memory_space<vmem>>, vector<1x1x1x4xf32>
      %122 = vector.shape_cast %121 : vector<1x1x1x4xf32> to vector<4xf32>
      %123 = vector.shape_cast %122 : vector<4xf32> to vector<1x1x4xf32>
      %124 = vector.broadcast %123 : vector<1x1x4xf32> to vector<1x16x4xf32>
      %125 = arith.mulf %120, %124 : vector<1x16x4xf32>
      %126 = arith.addf %115, %125 : vector<1x16x4xf32>
      %c0_i32_98 = arith.constant 0 : i32
      %127 = arith.addi %5, %c0_i32_98 : i32
      %c1_i32_99 = arith.constant 1 : i32
      %128 = arith.addi %127, %c1_i32_99 : i32
      %c0_100 = arith.constant 0 : index
      %129 = arith.index_cast %128 : i32 to index
      %c4_101 = arith.constant 4 : index
      %c0_102 = arith.constant 0 : index
      %130 = vector.load %arg2[%c0_100, %129, %c4_101, %c0_102] : memref<1x22x22x4xf32, #tpu.memory_space<vmem>>, vector<1x1x16x4xf32>
      %131 = vector.shape_cast %130 : vector<1x1x16x4xf32> to vector<1x16x4xf32>
      %c0_103 = arith.constant 0 : index
      %c1_104 = arith.constant 1 : index
      %c4_105 = arith.constant 4 : index
      %c0_106 = arith.constant 0 : index
      %132 = vector.load %arg3[%c0_103, %c1_104, %c4_105, %c0_106] : memref<1x7x7x4xf32, #tpu.memory_space<vmem>>, vector<1x1x1x4xf32>
      %133 = vector.shape_cast %132 : vector<1x1x1x4xf32> to vector<4xf32>
      %134 = vector.shape_cast %133 : vector<4xf32> to vector<1x1x4xf32>
      %135 = vector.broadcast %134 : vector<1x1x4xf32> to vector<1x16x4xf32>
      %136 = arith.mulf %131, %135 : vector<1x16x4xf32>
      %137 = arith.addf %126, %136 : vector<1x16x4xf32>
      %c0_i32_107 = arith.constant 0 : i32
      %138 = arith.addi %5, %c0_i32_107 : i32
      %c1_i32_108 = arith.constant 1 : i32
      %139 = arith.addi %138, %c1_i32_108 : i32
      %c0_109 = arith.constant 0 : index
      %140 = arith.index_cast %139 : i32 to index
      %c5_110 = arith.constant 5 : index
      %c0_111 = arith.constant 0 : index
      %141 = vector.load %arg2[%c0_109, %140, %c5_110, %c0_111] : memref<1x22x22x4xf32, #tpu.memory_space<vmem>>, vector<1x1x16x4xf32>
      %142 = vector.shape_cast %141 : vector<1x1x16x4xf32> to vector<1x16x4xf32>
      %c0_112 = arith.constant 0 : index
      %c1_113 = arith.constant 1 : index
      %c5_114 = arith.constant 5 : index
      %c0_115 = arith.constant 0 : index
      %143 = vector.load %arg3[%c0_112, %c1_113, %c5_114, %c0_115] : memref<1x7x7x4xf32, #tpu.memory_space<vmem>>, vector<1x1x1x4xf32>
      %144 = vector.shape_cast %143 : vector<1x1x1x4xf32> to vector<4xf32>
      %145 = vector.shape_cast %144 : vector<4xf32> to vector<1x1x4xf32>
      %146 = vector.broadcast %145 : vector<1x1x4xf32> to vector<1x16x4xf32>
      %147 = arith.mulf %142, %146 : vector<1x16x4xf32>
      %148 = arith.addf %137, %147 : vector<1x16x4xf32>
      %c0_i32_116 = arith.constant 0 : i32
      %149 = arith.addi %5, %c0_i32_116 : i32
      %c1_i32_117 = arith.constant 1 : i32
      %150 = arith.addi %149, %c1_i32_117 : i32
      %c0_118 = arith.constant 0 : index
      %151 = arith.index_cast %150 : i32 to index
      %c6_119 = arith.constant 6 : index
      %c0_120 = arith.constant 0 : index
      %152 = vector.load %arg2[%c0_118, %151, %c6_119, %c0_120] : memref<1x22x22x4xf32, #tpu.memory_space<vmem>>, vector<1x1x16x4xf32>
      %153 = vector.shape_cast %152 : vector<1x1x16x4xf32> to vector<1x16x4xf32>
      %c0_121 = arith.constant 0 : index
      %c1_122 = arith.constant 1 : index
      %c6_123 = arith.constant 6 : index
      %c0_124 = arith.constant 0 : index
      %154 = vector.load %arg3[%c0_121, %c1_122, %c6_123, %c0_124] : memref<1x7x7x4xf32, #tpu.memory_space<vmem>>, vector<1x1x1x4xf32>
      %155 = vector.shape_cast %154 : vector<1x1x1x4xf32> to vector<4xf32>
      %156 = vector.shape_cast %155 : vector<4xf32> to vector<1x1x4xf32>
      %157 = vector.broadcast %156 : vector<1x1x4xf32> to vector<1x16x4xf32>
      %158 = arith.mulf %153, %157 : vector<1x16x4xf32>
      %159 = arith.addf %148, %158 : vector<1x16x4xf32>
      %c0_i32_125 = arith.constant 0 : i32
      %160 = arith.addi %5, %c0_i32_125 : i32
      %c2_i32 = arith.constant 2 : i32
      %161 = arith.addi %160, %c2_i32 : i32
      %c0_126 = arith.constant 0 : index
      %162 = arith.index_cast %161 : i32 to index
      %c0_127 = arith.constant 0 : index
      %c0_128 = arith.constant 0 : index
      %163 = vector.load %arg2[%c0_126, %162, %c0_127, %c0_128] : memref<1x22x22x4xf32, #tpu.memory_space<vmem>>, vector<1x1x16x4xf32>
      %164 = vector.shape_cast %163 : vector<1x1x16x4xf32> to vector<1x16x4xf32>
      %c0_129 = arith.constant 0 : index
      %c2_130 = arith.constant 2 : index
      %c0_131 = arith.constant 0 : index
      %c0_132 = arith.constant 0 : index
      %165 = vector.load %arg3[%c0_129, %c2_130, %c0_131, %c0_132] : memref<1x7x7x4xf32, #tpu.memory_space<vmem>>, vector<1x1x1x4xf32>
      %166 = vector.shape_cast %165 : vector<1x1x1x4xf32> to vector<4xf32>
      %167 = vector.shape_cast %166 : vector<4xf32> to vector<1x1x4xf32>
      %168 = vector.broadcast %167 : vector<1x1x4xf32> to vector<1x16x4xf32>
      %169 = arith.mulf %164, %168 : vector<1x16x4xf32>
      %170 = arith.addf %159, %169 : vector<1x16x4xf32>
      %c0_i32_133 = arith.constant 0 : i32
      %171 = arith.addi %5, %c0_i32_133 : i32
      %c2_i32_134 = arith.constant 2 : i32
      %172 = arith.addi %171, %c2_i32_134 : i32
      %c0_135 = arith.constant 0 : index
      %173 = arith.index_cast %172 : i32 to index
      %c1_136 = arith.constant 1 : index
      %c0_137 = arith.constant 0 : index
      %174 = vector.load %arg2[%c0_135, %173, %c1_136, %c0_137] : memref<1x22x22x4xf32, #tpu.memory_space<vmem>>, vector<1x1x16x4xf32>
      %175 = vector.shape_cast %174 : vector<1x1x16x4xf32> to vector<1x16x4xf32>
      %c0_138 = arith.constant 0 : index
      %c2_139 = arith.constant 2 : index
      %c1_140 = arith.constant 1 : index
      %c0_141 = arith.constant 0 : index
      %176 = vector.load %arg3[%c0_138, %c2_139, %c1_140, %c0_141] : memref<1x7x7x4xf32, #tpu.memory_space<vmem>>, vector<1x1x1x4xf32>
      %177 = vector.shape_cast %176 : vector<1x1x1x4xf32> to vector<4xf32>
      %178 = vector.shape_cast %177 : vector<4xf32> to vector<1x1x4xf32>
      %179 = vector.broadcast %178 : vector<1x1x4xf32> to vector<1x16x4xf32>
      %180 = arith.mulf %175, %179 : vector<1x16x4xf32>
      %181 = arith.addf %170, %180 : vector<1x16x4xf32>
      %c0_i32_142 = arith.constant 0 : i32
      %182 = arith.addi %5, %c0_i32_142 : i32
      %c2_i32_143 = arith.constant 2 : i32
      %183 = arith.addi %182, %c2_i32_143 : i32
      %c0_144 = arith.constant 0 : index
      %184 = arith.index_cast %183 : i32 to index
      %c2_145 = arith.constant 2 : index
      %c0_146 = arith.constant 0 : index
      %185 = vector.load %arg2[%c0_144, %184, %c2_145, %c0_146] : memref<1x22x22x4xf32, #tpu.memory_space<vmem>>, vector<1x1x16x4xf32>
      %186 = vector.shape_cast %185 : vector<1x1x16x4xf32> to vector<1x16x4xf32>
      %c0_147 = arith.constant 0 : index
      %c2_148 = arith.constant 2 : index
      %c2_149 = arith.constant 2 : index
      %c0_150 = arith.constant 0 : index
      %187 = vector.load %arg3[%c0_147, %c2_148, %c2_149, %c0_150] : memref<1x7x7x4xf32, #tpu.memory_space<vmem>>, vector<1x1x1x4xf32>
      %188 = vector.shape_cast %187 : vector<1x1x1x4xf32> to vector<4xf32>
      %189 = vector.shape_cast %188 : vector<4xf32> to vector<1x1x4xf32>
      %190 = vector.broadcast %189 : vector<1x1x4xf32> to vector<1x16x4xf32>
      %191 = arith.mulf %186, %190 : vector<1x16x4xf32>
      %192 = arith.addf %181, %191 : vector<1x16x4xf32>
      %c0_i32_151 = arith.constant 0 : i32
      %193 = arith.addi %5, %c0_i32_151 : i32
      %c2_i32_152 = arith.constant 2 : i32
      %194 = arith.addi %193, %c2_i32_152 : i32
      %c0_153 = arith.constant 0 : index
      %195 = arith.index_cast %194 : i32 to index
      %c3_154 = arith.constant 3 : index
      %c0_155 = arith.constant 0 : index
      %196 = vector.load %arg2[%c0_153, %195, %c3_154, %c0_155] : memref<1x22x22x4xf32, #tpu.memory_space<vmem>>, vector<1x1x16x4xf32>
      %197 = vector.shape_cast %196 : vector<1x1x16x4xf32> to vector<1x16x4xf32>
      %c0_156 = arith.constant 0 : index
      %c2_157 = arith.constant 2 : index
      %c3_158 = arith.constant 3 : index
      %c0_159 = arith.constant 0 : index
      %198 = vector.load %arg3[%c0_156, %c2_157, %c3_158, %c0_159] : memref<1x7x7x4xf32, #tpu.memory_space<vmem>>, vector<1x1x1x4xf32>
      %199 = vector.shape_cast %198 : vector<1x1x1x4xf32> to vector<4xf32>
      %200 = vector.shape_cast %199 : vector<4xf32> to vector<1x1x4xf32>
      %201 = vector.broadcast %200 : vector<1x1x4xf32> to vector<1x16x4xf32>
      %202 = arith.mulf %197, %201 : vector<1x16x4xf32>
      %203 = arith.addf %192, %202 : vector<1x16x4xf32>
      %c0_i32_160 = arith.constant 0 : i32
      %204 = arith.addi %5, %c0_i32_160 : i32
      %c2_i32_161 = arith.constant 2 : i32
      %205 = arith.addi %204, %c2_i32_161 : i32
      %c0_162 = arith.constant 0 : index
      %206 = arith.index_cast %205 : i32 to index
      %c4_163 = arith.constant 4 : index
      %c0_164 = arith.constant 0 : index
      %207 = vector.load %arg2[%c0_162, %206, %c4_163, %c0_164] : memref<1x22x22x4xf32, #tpu.memory_space<vmem>>, vector<1x1x16x4xf32>
      %208 = vector.shape_cast %207 : vector<1x1x16x4xf32> to vector<1x16x4xf32>
      %c0_165 = arith.constant 0 : index
      %c2_166 = arith.constant 2 : index
      %c4_167 = arith.constant 4 : index
      %c0_168 = arith.constant 0 : index
      %209 = vector.load %arg3[%c0_165, %c2_166, %c4_167, %c0_168] : memref<1x7x7x4xf32, #tpu.memory_space<vmem>>, vector<1x1x1x4xf32>
      %210 = vector.shape_cast %209 : vector<1x1x1x4xf32> to vector<4xf32>
      %211 = vector.shape_cast %210 : vector<4xf32> to vector<1x1x4xf32>
      %212 = vector.broadcast %211 : vector<1x1x4xf32> to vector<1x16x4xf32>
      %213 = arith.mulf %208, %212 : vector<1x16x4xf32>
      %214 = arith.addf %203, %213 : vector<1x16x4xf32>
      %c0_i32_169 = arith.constant 0 : i32
      %215 = arith.addi %5, %c0_i32_169 : i32
      %c2_i32_170 = arith.constant 2 : i32
      %216 = arith.addi %215, %c2_i32_170 : i32
      %c0_171 = arith.constant 0 : index
      %217 = arith.index_cast %216 : i32 to index
      %c5_172 = arith.constant 5 : index
      %c0_173 = arith.constant 0 : index
      %218 = vector.load %arg2[%c0_171, %217, %c5_172, %c0_173] : memref<1x22x22x4xf32, #tpu.memory_space<vmem>>, vector<1x1x16x4xf32>
      %219 = vector.shape_cast %218 : vector<1x1x16x4xf32> to vector<1x16x4xf32>
      %c0_174 = arith.constant 0 : index
      %c2_175 = arith.constant 2 : index
      %c5_176 = arith.constant 5 : index
      %c0_177 = arith.constant 0 : index
      %220 = vector.load %arg3[%c0_174, %c2_175, %c5_176, %c0_177] : memref<1x7x7x4xf32, #tpu.memory_space<vmem>>, vector<1x1x1x4xf32>
      %221 = vector.shape_cast %220 : vector<1x1x1x4xf32> to vector<4xf32>
      %222 = vector.shape_cast %221 : vector<4xf32> to vector<1x1x4xf32>
      %223 = vector.broadcast %222 : vector<1x1x4xf32> to vector<1x16x4xf32>
      %224 = arith.mulf %219, %223 : vector<1x16x4xf32>
      %225 = arith.addf %214, %224 : vector<1x16x4xf32>
      %c0_i32_178 = arith.constant 0 : i32
      %226 = arith.addi %5, %c0_i32_178 : i32
      %c2_i32_179 = arith.constant 2 : i32
      %227 = arith.addi %226, %c2_i32_179 : i32
      %c0_180 = arith.constant 0 : index
      %228 = arith.index_cast %227 : i32 to index
      %c6_181 = arith.constant 6 : index
      %c0_182 = arith.constant 0 : index
      %229 = vector.load %arg2[%c0_180, %228, %c6_181, %c0_182] : memref<1x22x22x4xf32, #tpu.memory_space<vmem>>, vector<1x1x16x4xf32>
      %230 = vector.shape_cast %229 : vector<1x1x16x4xf32> to vector<1x16x4xf32>
      %c0_183 = arith.constant 0 : index
      %c2_184 = arith.constant 2 : index
      %c6_185 = arith.constant 6 : index
      %c0_186 = arith.constant 0 : index
      %231 = vector.load %arg3[%c0_183, %c2_184, %c6_185, %c0_186] : memref<1x7x7x4xf32, #tpu.memory_space<vmem>>, vector<1x1x1x4xf32>
      %232 = vector.shape_cast %231 : vector<1x1x1x4xf32> to vector<4xf32>
      %233 = vector.shape_cast %232 : vector<4xf32> to vector<1x1x4xf32>
      %234 = vector.broadcast %233 : vector<1x1x4xf32> to vector<1x16x4xf32>
      %235 = arith.mulf %230, %234 : vector<1x16x4xf32>
      %236 = arith.addf %225, %235 : vector<1x16x4xf32>
      %c0_i32_187 = arith.constant 0 : i32
      %237 = arith.addi %5, %c0_i32_187 : i32
      %c3_i32 = arith.constant 3 : i32
      %238 = arith.addi %237, %c3_i32 : i32
      %c0_188 = arith.constant 0 : index
      %239 = arith.index_cast %238 : i32 to index
      %c0_189 = arith.constant 0 : index
      %c0_190 = arith.constant 0 : index
      %240 = vector.load %arg2[%c0_188, %239, %c0_189, %c0_190] : memref<1x22x22x4xf32, #tpu.memory_space<vmem>>, vector<1x1x16x4xf32>
      %241 = vector.shape_cast %240 : vector<1x1x16x4xf32> to vector<1x16x4xf32>
      %c0_191 = arith.constant 0 : index
      %c3_192 = arith.constant 3 : index
      %c0_193 = arith.constant 0 : index
      %c0_194 = arith.constant 0 : index
      %242 = vector.load %arg3[%c0_191, %c3_192, %c0_193, %c0_194] : memref<1x7x7x4xf32, #tpu.memory_space<vmem>>, vector<1x1x1x4xf32>
      %243 = vector.shape_cast %242 : vector<1x1x1x4xf32> to vector<4xf32>
      %244 = vector.shape_cast %243 : vector<4xf32> to vector<1x1x4xf32>
      %245 = vector.broadcast %244 : vector<1x1x4xf32> to vector<1x16x4xf32>
      %246 = arith.mulf %241, %245 : vector<1x16x4xf32>
      %247 = arith.addf %236, %246 : vector<1x16x4xf32>
      %c0_i32_195 = arith.constant 0 : i32
      %248 = arith.addi %5, %c0_i32_195 : i32
      %c3_i32_196 = arith.constant 3 : i32
      %249 = arith.addi %248, %c3_i32_196 : i32
      %c0_197 = arith.constant 0 : index
      %250 = arith.index_cast %249 : i32 to index
      %c1_198 = arith.constant 1 : index
      %c0_199 = arith.constant 0 : index
      %251 = vector.load %arg2[%c0_197, %250, %c1_198, %c0_199] : memref<1x22x22x4xf32, #tpu.memory_space<vmem>>, vector<1x1x16x4xf32>
      %252 = vector.shape_cast %251 : vector<1x1x16x4xf32> to vector<1x16x4xf32>
      %c0_200 = arith.constant 0 : index
      %c3_201 = arith.constant 3 : index
      %c1_202 = arith.constant 1 : index
      %c0_203 = arith.constant 0 : index
      %253 = vector.load %arg3[%c0_200, %c3_201, %c1_202, %c0_203] : memref<1x7x7x4xf32, #tpu.memory_space<vmem>>, vector<1x1x1x4xf32>
      %254 = vector.shape_cast %253 : vector<1x1x1x4xf32> to vector<4xf32>
      %255 = vector.shape_cast %254 : vector<4xf32> to vector<1x1x4xf32>
      %256 = vector.broadcast %255 : vector<1x1x4xf32> to vector<1x16x4xf32>
      %257 = arith.mulf %252, %256 : vector<1x16x4xf32>
      %258 = arith.addf %247, %257 : vector<1x16x4xf32>
      %c0_i32_204 = arith.constant 0 : i32
      %259 = arith.addi %5, %c0_i32_204 : i32
      %c3_i32_205 = arith.constant 3 : i32
      %260 = arith.addi %259, %c3_i32_205 : i32
      %c0_206 = arith.constant 0 : index
      %261 = arith.index_cast %260 : i32 to index
      %c2_207 = arith.constant 2 : index
      %c0_208 = arith.constant 0 : index
      %262 = vector.load %arg2[%c0_206, %261, %c2_207, %c0_208] : memref<1x22x22x4xf32, #tpu.memory_space<vmem>>, vector<1x1x16x4xf32>
      %263 = vector.shape_cast %262 : vector<1x1x16x4xf32> to vector<1x16x4xf32>
      %c0_209 = arith.constant 0 : index
      %c3_210 = arith.constant 3 : index
      %c2_211 = arith.constant 2 : index
      %c0_212 = arith.constant 0 : index
      %264 = vector.load %arg3[%c0_209, %c3_210, %c2_211, %c0_212] : memref<1x7x7x4xf32, #tpu.memory_space<vmem>>, vector<1x1x1x4xf32>
      %265 = vector.shape_cast %264 : vector<1x1x1x4xf32> to vector<4xf32>
      %266 = vector.shape_cast %265 : vector<4xf32> to vector<1x1x4xf32>
      %267 = vector.broadcast %266 : vector<1x1x4xf32> to vector<1x16x4xf32>
      %268 = arith.mulf %263, %267 : vector<1x16x4xf32>
      %269 = arith.addf %258, %268 : vector<1x16x4xf32>
      %c0_i32_213 = arith.constant 0 : i32
      %270 = arith.addi %5, %c0_i32_213 : i32
      %c3_i32_214 = arith.constant 3 : i32
      %271 = arith.addi %270, %c3_i32_214 : i32
      %c0_215 = arith.constant 0 : index
      %272 = arith.index_cast %271 : i32 to index
      %c3_216 = arith.constant 3 : index
      %c0_217 = arith.constant 0 : index
      %273 = vector.load %arg2[%c0_215, %272, %c3_216, %c0_217] : memref<1x22x22x4xf32, #tpu.memory_space<vmem>>, vector<1x1x16x4xf32>
      %274 = vector.shape_cast %273 : vector<1x1x16x4xf32> to vector<1x16x4xf32>
      %c0_218 = arith.constant 0 : index
      %c3_219 = arith.constant 3 : index
      %c3_220 = arith.constant 3 : index
      %c0_221 = arith.constant 0 : index
      %275 = vector.load %arg3[%c0_218, %c3_219, %c3_220, %c0_221] : memref<1x7x7x4xf32, #tpu.memory_space<vmem>>, vector<1x1x1x4xf32>
      %276 = vector.shape_cast %275 : vector<1x1x1x4xf32> to vector<4xf32>
      %277 = vector.shape_cast %276 : vector<4xf32> to vector<1x1x4xf32>
      %278 = vector.broadcast %277 : vector<1x1x4xf32> to vector<1x16x4xf32>
      %279 = arith.mulf %274, %278 : vector<1x16x4xf32>
      %280 = arith.addf %269, %279 : vector<1x16x4xf32>
      %c0_i32_222 = arith.constant 0 : i32
      %281 = arith.addi %5, %c0_i32_222 : i32
      %c3_i32_223 = arith.constant 3 : i32
      %282 = arith.addi %281, %c3_i32_223 : i32
      %c0_224 = arith.constant 0 : index
      %283 = arith.index_cast %282 : i32 to index
      %c4_225 = arith.constant 4 : index
      %c0_226 = arith.constant 0 : index
      %284 = vector.load %arg2[%c0_224, %283, %c4_225, %c0_226] : memref<1x22x22x4xf32, #tpu.memory_space<vmem>>, vector<1x1x16x4xf32>
      %285 = vector.shape_cast %284 : vector<1x1x16x4xf32> to vector<1x16x4xf32>
      %c0_227 = arith.constant 0 : index
      %c3_228 = arith.constant 3 : index
      %c4_229 = arith.constant 4 : index
      %c0_230 = arith.constant 0 : index
      %286 = vector.load %arg3[%c0_227, %c3_228, %c4_229, %c0_230] : memref<1x7x7x4xf32, #tpu.memory_space<vmem>>, vector<1x1x1x4xf32>
      %287 = vector.shape_cast %286 : vector<1x1x1x4xf32> to vector<4xf32>
      %288 = vector.shape_cast %287 : vector<4xf32> to vector<1x1x4xf32>
      %289 = vector.broadcast %288 : vector<1x1x4xf32> to vector<1x16x4xf32>
      %290 = arith.mulf %285, %289 : vector<1x16x4xf32>
      %291 = arith.addf %280, %290 : vector<1x16x4xf32>
      %c0_i32_231 = arith.constant 0 : i32
      %292 = arith.addi %5, %c0_i32_231 : i32
      %c3_i32_232 = arith.constant 3 : i32
      %293 = arith.addi %292, %c3_i32_232 : i32
      %c0_233 = arith.constant 0 : index
      %294 = arith.index_cast %293 : i32 to index
      %c5_234 = arith.constant 5 : index
      %c0_235 = arith.constant 0 : index
      %295 = vector.load %arg2[%c0_233, %294, %c5_234, %c0_235] : memref<1x22x22x4xf32, #tpu.memory_space<vmem>>, vector<1x1x16x4xf32>
      %296 = vector.shape_cast %295 : vector<1x1x16x4xf32> to vector<1x16x4xf32>
      %c0_236 = arith.constant 0 : index
      %c3_237 = arith.constant 3 : index
      %c5_238 = arith.constant 5 : index
      %c0_239 = arith.constant 0 : index
      %297 = vector.load %arg3[%c0_236, %c3_237, %c5_238, %c0_239] : memref<1x7x7x4xf32, #tpu.memory_space<vmem>>, vector<1x1x1x4xf32>
      %298 = vector.shape_cast %297 : vector<1x1x1x4xf32> to vector<4xf32>
      %299 = vector.shape_cast %298 : vector<4xf32> to vector<1x1x4xf32>
      %300 = vector.broadcast %299 : vector<1x1x4xf32> to vector<1x16x4xf32>
      %301 = arith.mulf %296, %300 : vector<1x16x4xf32>
      %302 = arith.addf %291, %301 : vector<1x16x4xf32>
      %c0_i32_240 = arith.constant 0 : i32
      %303 = arith.addi %5, %c0_i32_240 : i32
      %c3_i32_241 = arith.constant 3 : i32
      %304 = arith.addi %303, %c3_i32_241 : i32
      %c0_242 = arith.constant 0 : index
      %305 = arith.index_cast %304 : i32 to index
      %c6_243 = arith.constant 6 : index
      %c0_244 = arith.constant 0 : index
      %306 = vector.load %arg2[%c0_242, %305, %c6_243, %c0_244] : memref<1x22x22x4xf32, #tpu.memory_space<vmem>>, vector<1x1x16x4xf32>
      %307 = vector.shape_cast %306 : vector<1x1x16x4xf32> to vector<1x16x4xf32>
      %c0_245 = arith.constant 0 : index
      %c3_246 = arith.constant 3 : index
      %c6_247 = arith.constant 6 : index
      %c0_248 = arith.constant 0 : index
      %308 = vector.load %arg3[%c0_245, %c3_246, %c6_247, %c0_248] : memref<1x7x7x4xf32, #tpu.memory_space<vmem>>, vector<1x1x1x4xf32>
      %309 = vector.shape_cast %308 : vector<1x1x1x4xf32> to vector<4xf32>
      %310 = vector.shape_cast %309 : vector<4xf32> to vector<1x1x4xf32>
      %311 = vector.broadcast %310 : vector<1x1x4xf32> to vector<1x16x4xf32>
      %312 = arith.mulf %307, %311 : vector<1x16x4xf32>
      %313 = arith.addf %302, %312 : vector<1x16x4xf32>
      %c0_i32_249 = arith.constant 0 : i32
      %314 = arith.addi %5, %c0_i32_249 : i32
      %c4_i32 = arith.constant 4 : i32
      %315 = arith.addi %314, %c4_i32 : i32
      %c0_250 = arith.constant 0 : index
      %316 = arith.index_cast %315 : i32 to index
      %c0_251 = arith.constant 0 : index
      %c0_252 = arith.constant 0 : index
      %317 = vector.load %arg2[%c0_250, %316, %c0_251, %c0_252] : memref<1x22x22x4xf32, #tpu.memory_space<vmem>>, vector<1x1x16x4xf32>
      %318 = vector.shape_cast %317 : vector<1x1x16x4xf32> to vector<1x16x4xf32>
      %c0_253 = arith.constant 0 : index
      %c4_254 = arith.constant 4 : index
      %c0_255 = arith.constant 0 : index
      %c0_256 = arith.constant 0 : index
      %319 = vector.load %arg3[%c0_253, %c4_254, %c0_255, %c0_256] : memref<1x7x7x4xf32, #tpu.memory_space<vmem>>, vector<1x1x1x4xf32>
      %320 = vector.shape_cast %319 : vector<1x1x1x4xf32> to vector<4xf32>
      %321 = vector.shape_cast %320 : vector<4xf32> to vector<1x1x4xf32>
      %322 = vector.broadcast %321 : vector<1x1x4xf32> to vector<1x16x4xf32>
      %323 = arith.mulf %318, %322 : vector<1x16x4xf32>
      %324 = arith.addf %313, %323 : vector<1x16x4xf32>
      %c0_i32_257 = arith.constant 0 : i32
      %325 = arith.addi %5, %c0_i32_257 : i32
      %c4_i32_258 = arith.constant 4 : i32
      %326 = arith.addi %325, %c4_i32_258 : i32
      %c0_259 = arith.constant 0 : index
      %327 = arith.index_cast %326 : i32 to index
      %c1_260 = arith.constant 1 : index
      %c0_261 = arith.constant 0 : index
      %328 = vector.load %arg2[%c0_259, %327, %c1_260, %c0_261] : memref<1x22x22x4xf32, #tpu.memory_space<vmem>>, vector<1x1x16x4xf32>
      %329 = vector.shape_cast %328 : vector<1x1x16x4xf32> to vector<1x16x4xf32>
      %c0_262 = arith.constant 0 : index
      %c4_263 = arith.constant 4 : index
      %c1_264 = arith.constant 1 : index
      %c0_265 = arith.constant 0 : index
      %330 = vector.load %arg3[%c0_262, %c4_263, %c1_264, %c0_265] : memref<1x7x7x4xf32, #tpu.memory_space<vmem>>, vector<1x1x1x4xf32>
      %331 = vector.shape_cast %330 : vector<1x1x1x4xf32> to vector<4xf32>
      %332 = vector.shape_cast %331 : vector<4xf32> to vector<1x1x4xf32>
      %333 = vector.broadcast %332 : vector<1x1x4xf32> to vector<1x16x4xf32>
      %334 = arith.mulf %329, %333 : vector<1x16x4xf32>
      %335 = arith.addf %324, %334 : vector<1x16x4xf32>
      %c0_i32_266 = arith.constant 0 : i32
      %336 = arith.addi %5, %c0_i32_266 : i32
      %c4_i32_267 = arith.constant 4 : i32
      %337 = arith.addi %336, %c4_i32_267 : i32
      %c0_268 = arith.constant 0 : index
      %338 = arith.index_cast %337 : i32 to index
      %c2_269 = arith.constant 2 : index
      %c0_270 = arith.constant 0 : index
      %339 = vector.load %arg2[%c0_268, %338, %c2_269, %c0_270] : memref<1x22x22x4xf32, #tpu.memory_space<vmem>>, vector<1x1x16x4xf32>
      %340 = vector.shape_cast %339 : vector<1x1x16x4xf32> to vector<1x16x4xf32>
      %c0_271 = arith.constant 0 : index
      %c4_272 = arith.constant 4 : index
      %c2_273 = arith.constant 2 : index
      %c0_274 = arith.constant 0 : index
      %341 = vector.load %arg3[%c0_271, %c4_272, %c2_273, %c0_274] : memref<1x7x7x4xf32, #tpu.memory_space<vmem>>, vector<1x1x1x4xf32>
      %342 = vector.shape_cast %341 : vector<1x1x1x4xf32> to vector<4xf32>
      %343 = vector.shape_cast %342 : vector<4xf32> to vector<1x1x4xf32>
      %344 = vector.broadcast %343 : vector<1x1x4xf32> to vector<1x16x4xf32>
      %345 = arith.mulf %340, %344 : vector<1x16x4xf32>
      %346 = arith.addf %335, %345 : vector<1x16x4xf32>
      %c0_i32_275 = arith.constant 0 : i32
      %347 = arith.addi %5, %c0_i32_275 : i32
      %c4_i32_276 = arith.constant 4 : i32
      %348 = arith.addi %347, %c4_i32_276 : i32
      %c0_277 = arith.constant 0 : index
      %349 = arith.index_cast %348 : i32 to index
      %c3_278 = arith.constant 3 : index
      %c0_279 = arith.constant 0 : index
      %350 = vector.load %arg2[%c0_277, %349, %c3_278, %c0_279] : memref<1x22x22x4xf32, #tpu.memory_space<vmem>>, vector<1x1x16x4xf32>
      %351 = vector.shape_cast %350 : vector<1x1x16x4xf32> to vector<1x16x4xf32>
      %c0_280 = arith.constant 0 : index
      %c4_281 = arith.constant 4 : index
      %c3_282 = arith.constant 3 : index
      %c0_283 = arith.constant 0 : index
      %352 = vector.load %arg3[%c0_280, %c4_281, %c3_282, %c0_283] : memref<1x7x7x4xf32, #tpu.memory_space<vmem>>, vector<1x1x1x4xf32>
      %353 = vector.shape_cast %352 : vector<1x1x1x4xf32> to vector<4xf32>
      %354 = vector.shape_cast %353 : vector<4xf32> to vector<1x1x4xf32>
      %355 = vector.broadcast %354 : vector<1x1x4xf32> to vector<1x16x4xf32>
      %356 = arith.mulf %351, %355 : vector<1x16x4xf32>
      %357 = arith.addf %346, %356 : vector<1x16x4xf32>
      %c0_i32_284 = arith.constant 0 : i32
      %358 = arith.addi %5, %c0_i32_284 : i32
      %c4_i32_285 = arith.constant 4 : i32
      %359 = arith.addi %358, %c4_i32_285 : i32
      %c0_286 = arith.constant 0 : index
      %360 = arith.index_cast %359 : i32 to index
      %c4_287 = arith.constant 4 : index
      %c0_288 = arith.constant 0 : index
      %361 = vector.load %arg2[%c0_286, %360, %c4_287, %c0_288] : memref<1x22x22x4xf32, #tpu.memory_space<vmem>>, vector<1x1x16x4xf32>
      %362 = vector.shape_cast %361 : vector<1x1x16x4xf32> to vector<1x16x4xf32>
      %c0_289 = arith.constant 0 : index
      %c4_290 = arith.constant 4 : index
      %c4_291 = arith.constant 4 : index
      %c0_292 = arith.constant 0 : index
      %363 = vector.load %arg3[%c0_289, %c4_290, %c4_291, %c0_292] : memref<1x7x7x4xf32, #tpu.memory_space<vmem>>, vector<1x1x1x4xf32>
      %364 = vector.shape_cast %363 : vector<1x1x1x4xf32> to vector<4xf32>
      %365 = vector.shape_cast %364 : vector<4xf32> to vector<1x1x4xf32>
      %366 = vector.broadcast %365 : vector<1x1x4xf32> to vector<1x16x4xf32>
      %367 = arith.mulf %362, %366 : vector<1x16x4xf32>
      %368 = arith.addf %357, %367 : vector<1x16x4xf32>
      %c0_i32_293 = arith.constant 0 : i32
      %369 = arith.addi %5, %c0_i32_293 : i32
      %c4_i32_294 = arith.constant 4 : i32
      %370 = arith.addi %369, %c4_i32_294 : i32
      %c0_295 = arith.constant 0 : index
      %371 = arith.index_cast %370 : i32 to index
      %c5_296 = arith.constant 5 : index
      %c0_297 = arith.constant 0 : index
      %372 = vector.load %arg2[%c0_295, %371, %c5_296, %c0_297] : memref<1x22x22x4xf32, #tpu.memory_space<vmem>>, vector<1x1x16x4xf32>
      %373 = vector.shape_cast %372 : vector<1x1x16x4xf32> to vector<1x16x4xf32>
      %c0_298 = arith.constant 0 : index
      %c4_299 = arith.constant 4 : index
      %c5_300 = arith.constant 5 : index
      %c0_301 = arith.constant 0 : index
      %374 = vector.load %arg3[%c0_298, %c4_299, %c5_300, %c0_301] : memref<1x7x7x4xf32, #tpu.memory_space<vmem>>, vector<1x1x1x4xf32>
      %375 = vector.shape_cast %374 : vector<1x1x1x4xf32> to vector<4xf32>
      %376 = vector.shape_cast %375 : vector<4xf32> to vector<1x1x4xf32>
      %377 = vector.broadcast %376 : vector<1x1x4xf32> to vector<1x16x4xf32>
      %378 = arith.mulf %373, %377 : vector<1x16x4xf32>
      %379 = arith.addf %368, %378 : vector<1x16x4xf32>
      %c0_i32_302 = arith.constant 0 : i32
      %380 = arith.addi %5, %c0_i32_302 : i32
      %c4_i32_303 = arith.constant 4 : i32
      %381 = arith.addi %380, %c4_i32_303 : i32
      %c0_304 = arith.constant 0 : index
      %382 = arith.index_cast %381 : i32 to index
      %c6_305 = arith.constant 6 : index
      %c0_306 = arith.constant 0 : index
      %383 = vector.load %arg2[%c0_304, %382, %c6_305, %c0_306] : memref<1x22x22x4xf32, #tpu.memory_space<vmem>>, vector<1x1x16x4xf32>
      %384 = vector.shape_cast %383 : vector<1x1x16x4xf32> to vector<1x16x4xf32>
      %c0_307 = arith.constant 0 : index
      %c4_308 = arith.constant 4 : index
      %c6_309 = arith.constant 6 : index
      %c0_310 = arith.constant 0 : index
      %385 = vector.load %arg3[%c0_307, %c4_308, %c6_309, %c0_310] : memref<1x7x7x4xf32, #tpu.memory_space<vmem>>, vector<1x1x1x4xf32>
      %386 = vector.shape_cast %385 : vector<1x1x1x4xf32> to vector<4xf32>
      %387 = vector.shape_cast %386 : vector<4xf32> to vector<1x1x4xf32>
      %388 = vector.broadcast %387 : vector<1x1x4xf32> to vector<1x16x4xf32>
      %389 = arith.mulf %384, %388 : vector<1x16x4xf32>
      %390 = arith.addf %379, %389 : vector<1x16x4xf32>
      %c0_i32_311 = arith.constant 0 : i32
      %391 = arith.addi %5, %c0_i32_311 : i32
      %c5_i32 = arith.constant 5 : i32
      %392 = arith.addi %391, %c5_i32 : i32
      %c0_312 = arith.constant 0 : index
      %393 = arith.index_cast %392 : i32 to index
      %c0_313 = arith.constant 0 : index
      %c0_314 = arith.constant 0 : index
      %394 = vector.load %arg2[%c0_312, %393, %c0_313, %c0_314] : memref<1x22x22x4xf32, #tpu.memory_space<vmem>>, vector<1x1x16x4xf32>
      %395 = vector.shape_cast %394 : vector<1x1x16x4xf32> to vector<1x16x4xf32>
      %c0_315 = arith.constant 0 : index
      %c5_316 = arith.constant 5 : index
      %c0_317 = arith.constant 0 : index
      %c0_318 = arith.constant 0 : index
      %396 = vector.load %arg3[%c0_315, %c5_316, %c0_317, %c0_318] : memref<1x7x7x4xf32, #tpu.memory_space<vmem>>, vector<1x1x1x4xf32>
      %397 = vector.shape_cast %396 : vector<1x1x1x4xf32> to vector<4xf32>
      %398 = vector.shape_cast %397 : vector<4xf32> to vector<1x1x4xf32>
      %399 = vector.broadcast %398 : vector<1x1x4xf32> to vector<1x16x4xf32>
      %400 = arith.mulf %395, %399 : vector<1x16x4xf32>
      %401 = arith.addf %390, %400 : vector<1x16x4xf32>
      %c0_i32_319 = arith.constant 0 : i32
      %402 = arith.addi %5, %c0_i32_319 : i32
      %c5_i32_320 = arith.constant 5 : i32
      %403 = arith.addi %402, %c5_i32_320 : i32
      %c0_321 = arith.constant 0 : index
      %404 = arith.index_cast %403 : i32 to index
      %c1_322 = arith.constant 1 : index
      %c0_323 = arith.constant 0 : index
      %405 = vector.load %arg2[%c0_321, %404, %c1_322, %c0_323] : memref<1x22x22x4xf32, #tpu.memory_space<vmem>>, vector<1x1x16x4xf32>
      %406 = vector.shape_cast %405 : vector<1x1x16x4xf32> to vector<1x16x4xf32>
      %c0_324 = arith.constant 0 : index
      %c5_325 = arith.constant 5 : index
      %c1_326 = arith.constant 1 : index
      %c0_327 = arith.constant 0 : index
      %407 = vector.load %arg3[%c0_324, %c5_325, %c1_326, %c0_327] : memref<1x7x7x4xf32, #tpu.memory_space<vmem>>, vector<1x1x1x4xf32>
      %408 = vector.shape_cast %407 : vector<1x1x1x4xf32> to vector<4xf32>
      %409 = vector.shape_cast %408 : vector<4xf32> to vector<1x1x4xf32>
      %410 = vector.broadcast %409 : vector<1x1x4xf32> to vector<1x16x4xf32>
      %411 = arith.mulf %406, %410 : vector<1x16x4xf32>
      %412 = arith.addf %401, %411 : vector<1x16x4xf32>
      %c0_i32_328 = arith.constant 0 : i32
      %413 = arith.addi %5, %c0_i32_328 : i32
      %c5_i32_329 = arith.constant 5 : i32
      %414 = arith.addi %413, %c5_i32_329 : i32
      %c0_330 = arith.constant 0 : index
      %415 = arith.index_cast %414 : i32 to index
      %c2_331 = arith.constant 2 : index
      %c0_332 = arith.constant 0 : index
      %416 = vector.load %arg2[%c0_330, %415, %c2_331, %c0_332] : memref<1x22x22x4xf32, #tpu.memory_space<vmem>>, vector<1x1x16x4xf32>
      %417 = vector.shape_cast %416 : vector<1x1x16x4xf32> to vector<1x16x4xf32>
      %c0_333 = arith.constant 0 : index
      %c5_334 = arith.constant 5 : index
      %c2_335 = arith.constant 2 : index
      %c0_336 = arith.constant 0 : index
      %418 = vector.load %arg3[%c0_333, %c5_334, %c2_335, %c0_336] : memref<1x7x7x4xf32, #tpu.memory_space<vmem>>, vector<1x1x1x4xf32>
      %419 = vector.shape_cast %418 : vector<1x1x1x4xf32> to vector<4xf32>
      %420 = vector.shape_cast %419 : vector<4xf32> to vector<1x1x4xf32>
      %421 = vector.broadcast %420 : vector<1x1x4xf32> to vector<1x16x4xf32>
      %422 = arith.mulf %417, %421 : vector<1x16x4xf32>
      %423 = arith.addf %412, %422 : vector<1x16x4xf32>
      %c0_i32_337 = arith.constant 0 : i32
      %424 = arith.addi %5, %c0_i32_337 : i32
      %c5_i32_338 = arith.constant 5 : i32
      %425 = arith.addi %424, %c5_i32_338 : i32
      %c0_339 = arith.constant 0 : index
      %426 = arith.index_cast %425 : i32 to index
      %c3_340 = arith.constant 3 : index
      %c0_341 = arith.constant 0 : index
      %427 = vector.load %arg2[%c0_339, %426, %c3_340, %c0_341] : memref<1x22x22x4xf32, #tpu.memory_space<vmem>>, vector<1x1x16x4xf32>
      %428 = vector.shape_cast %427 : vector<1x1x16x4xf32> to vector<1x16x4xf32>
      %c0_342 = arith.constant 0 : index
      %c5_343 = arith.constant 5 : index
      %c3_344 = arith.constant 3 : index
      %c0_345 = arith.constant 0 : index
      %429 = vector.load %arg3[%c0_342, %c5_343, %c3_344, %c0_345] : memref<1x7x7x4xf32, #tpu.memory_space<vmem>>, vector<1x1x1x4xf32>
      %430 = vector.shape_cast %429 : vector<1x1x1x4xf32> to vector<4xf32>
      %431 = vector.shape_cast %430 : vector<4xf32> to vector<1x1x4xf32>
      %432 = vector.broadcast %431 : vector<1x1x4xf32> to vector<1x16x4xf32>
      %433 = arith.mulf %428, %432 : vector<1x16x4xf32>
      %434 = arith.addf %423, %433 : vector<1x16x4xf32>
      %c0_i32_346 = arith.constant 0 : i32
      %435 = arith.addi %5, %c0_i32_346 : i32
      %c5_i32_347 = arith.constant 5 : i32
      %436 = arith.addi %435, %c5_i32_347 : i32
      %c0_348 = arith.constant 0 : index
      %437 = arith.index_cast %436 : i32 to index
      %c4_349 = arith.constant 4 : index
      %c0_350 = arith.constant 0 : index
      %438 = vector.load %arg2[%c0_348, %437, %c4_349, %c0_350] : memref<1x22x22x4xf32, #tpu.memory_space<vmem>>, vector<1x1x16x4xf32>
      %439 = vector.shape_cast %438 : vector<1x1x16x4xf32> to vector<1x16x4xf32>
      %c0_351 = arith.constant 0 : index
      %c5_352 = arith.constant 5 : index
      %c4_353 = arith.constant 4 : index
      %c0_354 = arith.constant 0 : index
      %440 = vector.load %arg3[%c0_351, %c5_352, %c4_353, %c0_354] : memref<1x7x7x4xf32, #tpu.memory_space<vmem>>, vector<1x1x1x4xf32>
      %441 = vector.shape_cast %440 : vector<1x1x1x4xf32> to vector<4xf32>
      %442 = vector.shape_cast %441 : vector<4xf32> to vector<1x1x4xf32>
      %443 = vector.broadcast %442 : vector<1x1x4xf32> to vector<1x16x4xf32>
      %444 = arith.mulf %439, %443 : vector<1x16x4xf32>
      %445 = arith.addf %434, %444 : vector<1x16x4xf32>
      %c0_i32_355 = arith.constant 0 : i32
      %446 = arith.addi %5, %c0_i32_355 : i32
      %c5_i32_356 = arith.constant 5 : i32
      %447 = arith.addi %446, %c5_i32_356 : i32
      %c0_357 = arith.constant 0 : index
      %448 = arith.index_cast %447 : i32 to index
      %c5_358 = arith.constant 5 : index
      %c0_359 = arith.constant 0 : index
      %449 = vector.load %arg2[%c0_357, %448, %c5_358, %c0_359] : memref<1x22x22x4xf32, #tpu.memory_space<vmem>>, vector<1x1x16x4xf32>
      %450 = vector.shape_cast %449 : vector<1x1x16x4xf32> to vector<1x16x4xf32>
      %c0_360 = arith.constant 0 : index
      %c5_361 = arith.constant 5 : index
      %c5_362 = arith.constant 5 : index
      %c0_363 = arith.constant 0 : index
      %451 = vector.load %arg3[%c0_360, %c5_361, %c5_362, %c0_363] : memref<1x7x7x4xf32, #tpu.memory_space<vmem>>, vector<1x1x1x4xf32>
      %452 = vector.shape_cast %451 : vector<1x1x1x4xf32> to vector<4xf32>
      %453 = vector.shape_cast %452 : vector<4xf32> to vector<1x1x4xf32>
      %454 = vector.broadcast %453 : vector<1x1x4xf32> to vector<1x16x4xf32>
      %455 = arith.mulf %450, %454 : vector<1x16x4xf32>
      %456 = arith.addf %445, %455 : vector<1x16x4xf32>
      %c0_i32_364 = arith.constant 0 : i32
      %457 = arith.addi %5, %c0_i32_364 : i32
      %c5_i32_365 = arith.constant 5 : i32
      %458 = arith.addi %457, %c5_i32_365 : i32
      %c0_366 = arith.constant 0 : index
      %459 = arith.index_cast %458 : i32 to index
      %c6_367 = arith.constant 6 : index
      %c0_368 = arith.constant 0 : index
      %460 = vector.load %arg2[%c0_366, %459, %c6_367, %c0_368] : memref<1x22x22x4xf32, #tpu.memory_space<vmem>>, vector<1x1x16x4xf32>
      %461 = vector.shape_cast %460 : vector<1x1x16x4xf32> to vector<1x16x4xf32>
      %c0_369 = arith.constant 0 : index
      %c5_370 = arith.constant 5 : index
      %c6_371 = arith.constant 6 : index
      %c0_372 = arith.constant 0 : index
      %462 = vector.load %arg3[%c0_369, %c5_370, %c6_371, %c0_372] : memref<1x7x7x4xf32, #tpu.memory_space<vmem>>, vector<1x1x1x4xf32>
      %463 = vector.shape_cast %462 : vector<1x1x1x4xf32> to vector<4xf32>
      %464 = vector.shape_cast %463 : vector<4xf32> to vector<1x1x4xf32>
      %465 = vector.broadcast %464 : vector<1x1x4xf32> to vector<1x16x4xf32>
      %466 = arith.mulf %461, %465 : vector<1x16x4xf32>
      %467 = arith.addf %456, %466 : vector<1x16x4xf32>
      %c0_i32_373 = arith.constant 0 : i32
      %468 = arith.addi %5, %c0_i32_373 : i32
      %c6_i32 = arith.constant 6 : i32
      %469 = arith.addi %468, %c6_i32 : i32
      %c0_374 = arith.constant 0 : index
      %470 = arith.index_cast %469 : i32 to index
      %c0_375 = arith.constant 0 : index
      %c0_376 = arith.constant 0 : index
      %471 = vector.load %arg2[%c0_374, %470, %c0_375, %c0_376] : memref<1x22x22x4xf32, #tpu.memory_space<vmem>>, vector<1x1x16x4xf32>
      %472 = vector.shape_cast %471 : vector<1x1x16x4xf32> to vector<1x16x4xf32>
      %c0_377 = arith.constant 0 : index
      %c6_378 = arith.constant 6 : index
      %c0_379 = arith.constant 0 : index
      %c0_380 = arith.constant 0 : index
      %473 = vector.load %arg3[%c0_377, %c6_378, %c0_379, %c0_380] : memref<1x7x7x4xf32, #tpu.memory_space<vmem>>, vector<1x1x1x4xf32>
      %474 = vector.shape_cast %473 : vector<1x1x1x4xf32> to vector<4xf32>
      %475 = vector.shape_cast %474 : vector<4xf32> to vector<1x1x4xf32>
      %476 = vector.broadcast %475 : vector<1x1x4xf32> to vector<1x16x4xf32>
      %477 = arith.mulf %472, %476 : vector<1x16x4xf32>
      %478 = arith.addf %467, %477 : vector<1x16x4xf32>
      %c0_i32_381 = arith.constant 0 : i32
      %479 = arith.addi %5, %c0_i32_381 : i32
      %c6_i32_382 = arith.constant 6 : i32
      %480 = arith.addi %479, %c6_i32_382 : i32
      %c0_383 = arith.constant 0 : index
      %481 = arith.index_cast %480 : i32 to index
      %c1_384 = arith.constant 1 : index
      %c0_385 = arith.constant 0 : index
      %482 = vector.load %arg2[%c0_383, %481, %c1_384, %c0_385] : memref<1x22x22x4xf32, #tpu.memory_space<vmem>>, vector<1x1x16x4xf32>
      %483 = vector.shape_cast %482 : vector<1x1x16x4xf32> to vector<1x16x4xf32>
      %c0_386 = arith.constant 0 : index
      %c6_387 = arith.constant 6 : index
      %c1_388 = arith.constant 1 : index
      %c0_389 = arith.constant 0 : index
      %484 = vector.load %arg3[%c0_386, %c6_387, %c1_388, %c0_389] : memref<1x7x7x4xf32, #tpu.memory_space<vmem>>, vector<1x1x1x4xf32>
      %485 = vector.shape_cast %484 : vector<1x1x1x4xf32> to vector<4xf32>
      %486 = vector.shape_cast %485 : vector<4xf32> to vector<1x1x4xf32>
      %487 = vector.broadcast %486 : vector<1x1x4xf32> to vector<1x16x4xf32>
      %488 = arith.mulf %483, %487 : vector<1x16x4xf32>
      %489 = arith.addf %478, %488 : vector<1x16x4xf32>
      %c0_i32_390 = arith.constant 0 : i32
      %490 = arith.addi %5, %c0_i32_390 : i32
      %c6_i32_391 = arith.constant 6 : i32
      %491 = arith.addi %490, %c6_i32_391 : i32
      %c0_392 = arith.constant 0 : index
      %492 = arith.index_cast %491 : i32 to index
      %c2_393 = arith.constant 2 : index
      %c0_394 = arith.constant 0 : index
      %493 = vector.load %arg2[%c0_392, %492, %c2_393, %c0_394] : memref<1x22x22x4xf32, #tpu.memory_space<vmem>>, vector<1x1x16x4xf32>
      %494 = vector.shape_cast %493 : vector<1x1x16x4xf32> to vector<1x16x4xf32>
      %c0_395 = arith.constant 0 : index
      %c6_396 = arith.constant 6 : index
      %c2_397 = arith.constant 2 : index
      %c0_398 = arith.constant 0 : index
      %495 = vector.load %arg3[%c0_395, %c6_396, %c2_397, %c0_398] : memref<1x7x7x4xf32, #tpu.memory_space<vmem>>, vector<1x1x1x4xf32>
      %496 = vector.shape_cast %495 : vector<1x1x1x4xf32> to vector<4xf32>
      %497 = vector.shape_cast %496 : vector<4xf32> to vector<1x1x4xf32>
      %498 = vector.broadcast %497 : vector<1x1x4xf32> to vector<1x16x4xf32>
      %499 = arith.mulf %494, %498 : vector<1x16x4xf32>
      %500 = arith.addf %489, %499 : vector<1x16x4xf32>
      %c0_i32_399 = arith.constant 0 : i32
      %501 = arith.addi %5, %c0_i32_399 : i32
      %c6_i32_400 = arith.constant 6 : i32
      %502 = arith.addi %501, %c6_i32_400 : i32
      %c0_401 = arith.constant 0 : index
      %503 = arith.index_cast %502 : i32 to index
      %c3_402 = arith.constant 3 : index
      %c0_403 = arith.constant 0 : index
      %504 = vector.load %arg2[%c0_401, %503, %c3_402, %c0_403] : memref<1x22x22x4xf32, #tpu.memory_space<vmem>>, vector<1x1x16x4xf32>
      %505 = vector.shape_cast %504 : vector<1x1x16x4xf32> to vector<1x16x4xf32>
      %c0_404 = arith.constant 0 : index
      %c6_405 = arith.constant 6 : index
      %c3_406 = arith.constant 3 : index
      %c0_407 = arith.constant 0 : index
      %506 = vector.load %arg3[%c0_404, %c6_405, %c3_406, %c0_407] : memref<1x7x7x4xf32, #tpu.memory_space<vmem>>, vector<1x1x1x4xf32>
      %507 = vector.shape_cast %506 : vector<1x1x1x4xf32> to vector<4xf32>
      %508 = vector.shape_cast %507 : vector<4xf32> to vector<1x1x4xf32>
      %509 = vector.broadcast %508 : vector<1x1x4xf32> to vector<1x16x4xf32>
      %510 = arith.mulf %505, %509 : vector<1x16x4xf32>
      %511 = arith.addf %500, %510 : vector<1x16x4xf32>
      %c0_i32_408 = arith.constant 0 : i32
      %512 = arith.addi %5, %c0_i32_408 : i32
      %c6_i32_409 = arith.constant 6 : i32
      %513 = arith.addi %512, %c6_i32_409 : i32
      %c0_410 = arith.constant 0 : index
      %514 = arith.index_cast %513 : i32 to index
      %c4_411 = arith.constant 4 : index
      %c0_412 = arith.constant 0 : index
      %515 = vector.load %arg2[%c0_410, %514, %c4_411, %c0_412] : memref<1x22x22x4xf32, #tpu.memory_space<vmem>>, vector<1x1x16x4xf32>
      %516 = vector.shape_cast %515 : vector<1x1x16x4xf32> to vector<1x16x4xf32>
      %c0_413 = arith.constant 0 : index
      %c6_414 = arith.constant 6 : index
      %c4_415 = arith.constant 4 : index
      %c0_416 = arith.constant 0 : index
      %517 = vector.load %arg3[%c0_413, %c6_414, %c4_415, %c0_416] : memref<1x7x7x4xf32, #tpu.memory_space<vmem>>, vector<1x1x1x4xf32>
      %518 = vector.shape_cast %517 : vector<1x1x1x4xf32> to vector<4xf32>
      %519 = vector.shape_cast %518 : vector<4xf32> to vector<1x1x4xf32>
      %520 = vector.broadcast %519 : vector<1x1x4xf32> to vector<1x16x4xf32>
      %521 = arith.mulf %516, %520 : vector<1x16x4xf32>
      %522 = arith.addf %511, %521 : vector<1x16x4xf32>
      %c0_i32_417 = arith.constant 0 : i32
      %523 = arith.addi %5, %c0_i32_417 : i32
      %c6_i32_418 = arith.constant 6 : i32
      %524 = arith.addi %523, %c6_i32_418 : i32
      %c0_419 = arith.constant 0 : index
      %525 = arith.index_cast %524 : i32 to index
      %c5_420 = arith.constant 5 : index
      %c0_421 = arith.constant 0 : index
      %526 = vector.load %arg2[%c0_419, %525, %c5_420, %c0_421] : memref<1x22x22x4xf32, #tpu.memory_space<vmem>>, vector<1x1x16x4xf32>
      %527 = vector.shape_cast %526 : vector<1x1x16x4xf32> to vector<1x16x4xf32>
      %c0_422 = arith.constant 0 : index
      %c6_423 = arith.constant 6 : index
      %c5_424 = arith.constant 5 : index
      %c0_425 = arith.constant 0 : index
      %528 = vector.load %arg3[%c0_422, %c6_423, %c5_424, %c0_425] : memref<1x7x7x4xf32, #tpu.memory_space<vmem>>, vector<1x1x1x4xf32>
      %529 = vector.shape_cast %528 : vector<1x1x1x4xf32> to vector<4xf32>
      %530 = vector.shape_cast %529 : vector<4xf32> to vector<1x1x4xf32>
      %531 = vector.broadcast %530 : vector<1x1x4xf32> to vector<1x16x4xf32>
      %532 = arith.mulf %527, %531 : vector<1x16x4xf32>
      %533 = arith.addf %522, %532 : vector<1x16x4xf32>
      %c0_i32_426 = arith.constant 0 : i32
      %534 = arith.addi %5, %c0_i32_426 : i32
      %c6_i32_427 = arith.constant 6 : i32
      %535 = arith.addi %534, %c6_i32_427 : i32
      %c0_428 = arith.constant 0 : index
      %536 = arith.index_cast %535 : i32 to index
      %c6_429 = arith.constant 6 : index
      %c0_430 = arith.constant 0 : index
      %537 = vector.load %arg2[%c0_428, %536, %c6_429, %c0_430] : memref<1x22x22x4xf32, #tpu.memory_space<vmem>>, vector<1x1x16x4xf32>
      %538 = vector.shape_cast %537 : vector<1x1x16x4xf32> to vector<1x16x4xf32>
      %c0_431 = arith.constant 0 : index
      %c6_432 = arith.constant 6 : index
      %c6_433 = arith.constant 6 : index
      %c0_434 = arith.constant 0 : index
      %539 = vector.load %arg3[%c0_431, %c6_432, %c6_433, %c0_434] : memref<1x7x7x4xf32, #tpu.memory_space<vmem>>, vector<1x1x1x4xf32>
      %540 = vector.shape_cast %539 : vector<1x1x1x4xf32> to vector<4xf32>
      %541 = vector.shape_cast %540 : vector<4xf32> to vector<1x1x4xf32>
      %542 = vector.broadcast %541 : vector<1x1x4xf32> to vector<1x16x4xf32>
      %543 = arith.mulf %538, %542 : vector<1x16x4xf32>
      %544 = arith.addf %533, %543 : vector<1x16x4xf32>
      %c0_435 = arith.constant 0 : index
      %545 = arith.index_cast %5 : i32 to index
      %c0_436 = arith.constant 0 : index
      %c0_437 = arith.constant 0 : index
      %546 = vector.load %arg5[%c0_435, %545, %c0_436, %c0_437] : memref<1x16x16x4xf32, #tpu.memory_space<vmem>>, vector<1x1x16x4xf32>
      %547 = vector.shape_cast %546 : vector<1x1x16x4xf32> to vector<1x16x4xf32>
      %548 = vector.shape_cast %544 : vector<1x16x4xf32> to vector<1x1x16x4xf32>
      tpu.vector_store %arg5[%c0_435, %545, %c0_436, %c0_437], %548 {strides = array<i32>} : memref<1x16x16x4xf32, #tpu.memory_space<vmem>>, vector<1x1x16x4xf32>,
    }
    %c16_i32_2 = arith.constant 16 : i32
    return
  }
  func.func @transform_0(%arg0: i32, %arg1: i32) -> (i32, i32, i32, i32) {
    %c0_i32 = arith.constant 0 : i32
    %c0_i32_0 = arith.constant 0 : i32
    %c0_i32_1 = arith.constant 0 : i32
    return %arg0, %c0_i32, %c0_i32_0, %arg1 : i32, i32, i32, i32
  }
  func.func @transform_1(%arg0: i32, %arg1: i32) -> (i32, i32, i32, i32) {
    %c0_i32 = arith.constant 0 : i32
    %c0_i32_0 = arith.constant 0 : i32
    %c0_i32_1 = arith.constant 0 : i32
    %c0_i32_2 = arith.constant 0 : i32
    return %arg1, %c0_i32, %c0_i32_0, %c0_i32_1 : i32, i32, i32, i32
  }
  func.func @transform_2(%arg0: i32, %arg1: i32) -> (i32, i32, i32) {
    %c0_i32 = arith.constant 0 : i32
    %c0_i32_0 = arith.constant 0 : i32
    %c0_i32_1 = arith.constant 0 : i32
    return %arg1, %c0_i32, %c0_i32_0 : i32, i32, i32
  }
  func.func @transform_3(%arg0: i32, %arg1: i32) -> (i32, i32, i32, i32) {
    %c0_i32 = arith.constant 0 : i32
    %c0_i32_0 = arith.constant 0 : i32
    %c0_i32_1 = arith.constant 0 : i32
    return %arg0, %c0_i32, %c0_i32_0, %arg1 : i32, i32, i32, i32
  }
}

</mosaic_0001>

<llo_original>
// kernel: _multiscale_dwconv.1
$region0: #{_multiscale_dwconv.1}
  #allocation0 [shape = 'u32[]', space=smem, size = 0x4, offset = 0x4, fixed_abs, tag = 'smem constant byte address 0x4 - core index']
  #allocation1 [shape = 'u32[144,128]{1,0:T(1,128)}', space=vmem, size = 0x12000, scoped, tag = 'internal scratch']
  %s0 = inlined_call_operand.vmem [shape: f32[2,22,22,4], index: 0, kind: input, shape index: {}]
  %s1 = inlined_call_operand.vmem [shape: f32[1,7,7,4], index: 1, kind: input, shape index: {}]
  %s2 = inlined_call_operand.vmem [shape: f32[1,1,4], index: 2, kind: input, shape index: {}]
  %s3 = inlined_call_operand.vmem [shape: f32[2,16,16,4], index: 3, kind: output, shape index: {}]
  %s4 = sld [smem:[#allocation0]]
  $region52: #{_multiscale_dwconv.1} parent=0
    _
  %s6 = ssub.s32 1, %s4
  %s7 = scalar_select 0, %s6, %s4
  loop: start=0, step=1, limit=4
  $region2: #{_multiscale_dwconv.1} parent=0 // loop_pre_header
    _
  $region3: #{_multiscale_dwconv.1} parent=0 // loop_header
    %s9 = sphi 0, %s13
    %p10 = scmp.ge.s32.totalorder %s9, 4
    %s16 = sphi 0, %s28
    %s17 = sphi 0, %s24
    %s18 = sphi 0, %s16
    %s19 = sphi 0, %s17
    %s20 = sphi 0, %s18
    %s21 = sphi 0, %s19
    %s33 = sphi 0, %s35
    %s36 = sphi 0, %s33
    %s37 = sphi 0, %s36
    %s53 = sphi 0, %s37
    %s59 = sphi 0, %s61
    %s62 = sphi 0, %s59
    %s63 = sphi 0, %s62
    %s79 = sphi 0, %s63
    %s85 = sphi 0, %s87
    %s88 = sphi 0, %s85
    %s89 = sphi 0, %s88
    %s105 = sphi 0, %s89
    %s113 = sphi 0, %s115
    %s116 = sphi 0, %s113
    %s117 = sphi 0, %s116
    %s133 = sphi 0, %s117
  $region4: #{_multiscale_dwconv.1} parent=0 // loop_header_branch
    %12 = sbr.rel (%p10) target = $region8
  $region5: #{_multiscale_dwconv.1} parent=0 // loop_body
    %s14 = ssub.s32 %s9, 1
    %s15 = ssub.s32 %s9, 2
    %s22 = sadd.s32 1, %s17
    %p23 = scmp.ge.s32.totalorder %s22, 1
    %s24 = scalar_select %p23, 0, %s22
    %s25 = sadd.s32 1, %s16
    %s26 = scalar_select %p23, %s25, %s16
    %p27 = scmp.ge.s32.totalorder %s26, 2
    %s28 = scalar_select %p27, 0, %s26
    %s29 = ssub.s32 %s16, %s28
    %s30 = ssub.s32 %s17, %s24
    %s31 = sor.u32 %s29, %s30
    %p32 = scmp.eq.s32.totalorder %s31, 0
    %s34 = sadd.s32 %s33, 1
    %s35 = scalar_select %p32, %s33, %s34
    %p38 = pneg %p32
    %p39 = scmp.eq.s32.totalorder %s9, 1
    %p40 = por %p38, %p39
    %p41 = scmp.ne.s32.totalorder %s33, %s36
    %p42 = scmp.eq.s32.totalorder %s9, 0
    %p43 = por %p41, %p42
    %p44 = scmp.ne.s32.totalorder %s33, %s36
    %p45 = scmp.eq.s32.totalorder %s14, 1
    %p46 = por %p44, %p45
    %p47 = scmp.ne.s32.totalorder %s36, %s37
    %p48 = scmp.eq.s32.totalorder %s14, 0
    %p49 = por %p47, %p48
    %p50 = scmp.ne.s32.totalorder %s36, %s37
    %p51 = scmp.eq.s32.totalorder %s15, 1
    %p52 = por %p50, %p51
    %p54 = scmp.ne.s32.totalorder %s37, %s53
    %p55 = scmp.eq.s32.totalorder %s15, 0
    %p56 = por %p54, %p55
    %s57 = ssub.s32 %s17, %s24
    %p58 = scmp.eq.s32.totalorder %s57, 0
    %s60 = sadd.s32 %s59, 1
    %s61 = scalar_select %p58, %s59, %s60
    %p64 = pneg %p58
    %p65 = scmp.eq.s32.totalorder %s9, 1
    %p66 = por %p64, %p65
    %p67 = scmp.ne.s32.totalorder %s59, %s62
    %p68 = scmp.eq.s32.totalorder %s9, 0
    %p69 = por %p67, %p68
    %p70 = scmp.ne.s32.totalorder %s59, %s62
    %p71 = scmp.eq.s32.totalorder %s14, 1
    %p72 = por %p70, %p71
    %p73 = scmp.ne.s32.totalorder %s62, %s63
    %p74 = scmp.eq.s32.totalorder %s14, 0
    %p75 = por %p73, %p74
    %p76 = scmp.ne.s32.totalorder %s62, %s63
    %p77 = scmp.eq.s32.totalorder %s15, 1
    %p78 = por %p76, %p77
    %p80 = scmp.ne.s32.totalorder %s63, %s79
    %p81 = scmp.eq.s32.totalorder %s15, 0
    %p82 = por %p80, %p81
    %s83 = ssub.s32 %s17, %s24
    %p84 = scmp.eq.s32.totalorder %s83, 0
    %s86 = sadd.s32 %s85, 1
    %s87 = scalar_select %p84, %s85, %s86
    %p90 = pneg %p84
    %p91 = scmp.eq.s32.totalorder %s9, 1
    %p92 = por %p90, %p91
    %p93 = scmp.ne.s32.totalorder %s85, %s88
    %p94 = scmp.eq.s32.totalorder %s9, 0
    %p95 = por %p93, %p94
    %p96 = scmp.ne.s32.totalorder %s85, %s88
    %p97 = scmp.eq.s32.totalorder %s14, 1
    %p98 = por %p96, %p97
    %p99 = scmp.ne.s32.totalorder %s88, %s89
    %p100 = scmp.eq.s32.totalorder %s14, 0
    %p101 = por %p99, %p100
    %p102 = scmp.ne.s32.totalorder %s88, %s89
    %p103 = scmp.eq.s32.totalorder %s15, 1
    %p104 = por %p102, %p103
    %p106 = scmp.ne.s32.totalorder %s89, %s105
    %p107 = scmp.eq.s32.totalorder %s15, 0
    %p108 = por %p106, %p107
    %s109 = ssub.s32 %s16, %s28
    %s110 = ssub.s32 %s17, %s24
    %s111 = sor.u32 %s109, %s110
    %p112 = scmp.eq.s32.totalorder %s111, 0
    %s114 = sadd.s32 %s113, 1
    %s115 = scalar_select %p112, %s113, %s114
    %p118 = pneg %p112
    %p119 = scmp.eq.s32.totalorder %s9, 1
    %p120 = por %p118, %p119
    %p121 = scmp.ne.s32.totalorder %s113, %s116
    %p122 = scmp.eq.s32.totalorder %s9, 0
    %p123 = por %p121, %p122
    %p124 = scmp.ne.s32.totalorder %s113, %s116
    %p125 = scmp.eq.s32.totalorder %s14, 1
    %p126 = por %p124, %p125
    %p127 = scmp.ne.s32.totalorder %s116, %s117
    %p128 = scmp.eq.s32.totalorder %s14, 0
    %p129 = por %p127, %p128
    %p130 = scmp.ne.s32.totalorder %s116, %s117
    %p131 = scmp.eq.s32.totalorder %s15, 1
    %p132 = por %p130, %p131
    %p134 = scmp.ne.s32.totalorder %s117, %s133
    %p135 = scmp.eq.s32.totalorder %s15, 0
    %p136 = por %p134, %p135
    %p137 = scmp.le.s32.totalorder 1, %s9
    %p138 = scmp.lt.s32.totalorder %s9, 3
    %p139 = pnand %p137, %p138
    %p140 = pneg %p139
    // Predicated region
    $region9: #{_multiscale_dwconv.1} parent=5 // pred_check
      _
    $region10: #{_multiscale_dwconv.1} parent=5 // pred_check_branch
      %142 = sbr.rel (%p139) target = $region12
    $region11: #{_multiscale_dwconv.1} parent=5 // pred_region
      %s143 = ssub.s32 %s9, 1
      // Predicated region
      $region13: #{_multiscale_dwconv.1} parent=11 // pred_check
        %p144 = pneg %p75
      $region14: #{_multiscale_dwconv.1} parent=11 // pred_check_branch
        %146 = sbr.rel (%p144) target = $region16
      $region15: #{_multiscale_dwconv.1} parent=11 // pred_region
        %p147 = scmp.lt.s32.totalorder %s19, 0
        %s148 = scalar_select %p147, %s19, 0
        %s149 = smul.addr %s148, 7
        %s150 = smul.addr %s149, 8
        %s151 = scalar_lea.vmem %s1, %s150
      $region16: #{_multiscale_dwconv.1} parent=11 // pred_fallthru
        _
      // Predicated region
      $region17: #{_multiscale_dwconv.1} parent=11 // pred_check
        %p152 = pneg %p101
      $region18: #{_multiscale_dwconv.1} parent=11 // pred_check_branch
        %154 = sbr.rel (%p152) target = $region20
      $region19: #{_multiscale_dwconv.1} parent=11 // pred_region
        %p155 = scmp.lt.s32.totalorder %s19, 0
        %s156 = scalar_select %p155, %s19, 0
        %s157 = scalar_lea.vmem %s2, %s156
      $region20: #{_multiscale_dwconv.1} parent=11 // pred_fallthru
        _
    $region12: #{_multiscale_dwconv.1} parent=5 // pred_fallthru
      _
    %p158 = scmp.lt.s32.totalorder %s9, 2
    // Predicated region
    $region21: #{_multiscale_dwconv.1} parent=5 // pred_check
      %p159 = pneg %p158
    $region22: #{_multiscale_dwconv.1} parent=5 // pred_check_branch
      %161 = sbr.rel (%p159) target = $region24
    $region23: #{_multiscale_dwconv.1} parent=5 // pred_region
      // Predicated region
      $region25: #{_multiscale_dwconv.1} parent=23 // pred_check
        %p162 = pneg %p43
      $region26: #{_multiscale_dwconv.1} parent=23 // pred_check_branch
        %164 = sbr.rel (%p162) target = $region28
      $region27: #{_multiscale_dwconv.1} parent=23 // pred_region
        %p165 = scmp.lt.s32.totalorder %s16, 1
        %s166 = scalar_select %p165, %s16, 1
        %p167 = scmp.lt.s32.totalorder %s17, 0
        %s168 = scalar_select %p167, %s17, 0
        %s169 = smul.addr %s166, 66
        %s170 = sadd.s32 %s168, %s169
        %s171 = smul.addr %s170, 8
        %s172 = scalar_lea.vmem %s0, %s171
      $region28: #{_multiscale_dwconv.1} parent=23 // pred_fallthru
        _
    $region24: #{_multiscale_dwconv.1} parent=5 // pred_fallthru
      _
    %p173 = scmp.le.s32.totalorder 1, %s9
    %p174 = scmp.lt.s32.totalorder %s9, 3
    %p175 = pnand %p173, %p174
    %p176 = pneg %p175
    // Predicated region
    $region29: #{_multiscale_dwconv.1} parent=5 // pred_check
      _
    $region30: #{_multiscale_dwconv.1} parent=5 // pred_check_branch
      %178 = sbr.rel (%p175) target = $region32
    $region31: #{_multiscale_dwconv.1} parent=5 // pred_region
      %s179 = ssub.s32 %s9, 1
      %p180 = scmp.lt.s32.totalorder %s18, 1
      %s181 = scalar_select %p180, %s18, 1
      %p182 = scmp.lt.s32.totalorder %s19, 0
      %s183 = scalar_select %p182, %s19, 0
      %s184 = smul.addr %s181, 66
      %s185 = sadd.s32 %s183, %s184
      %s186 = smul.addr %s185, 8
      %s187 = scalar_lea.vmem %s0, %s186
      %p188 = pneg %p49
      %p189 = pneg %p46
      %p190 = scmp.lt.s32.totalorder %s19, 0
      %s191 = scalar_select %p190, %s19, 0
      %s192 = smul.addr %s191, 7
      %s193 = smul.addr %s192, 8
      %s194 = scalar_lea.vmem %s1, %s193
      %p195 = pneg %p75
      %p196 = pneg %p72
      %p197 = scmp.lt.s32.totalorder %s19, 0
      %s198 = scalar_select %p197, %s19, 0
      %s199 = scalar_lea.vmem %s2, %s198
      %p200 = pneg %p101
      %p201 = pneg %p98
      %p202 = pneg %p129
      %p203 = pneg %p126
      %p204 = scmp.lt.s32.totalorder %s18, 1
      %s205 = scalar_select %p204, %s18, 1
      %p206 = scmp.lt.s32.totalorder %s19, 0
      %s207 = scalar_select %p206, %s19, 0
      %s208 = smul.addr %s205, 32
      %s209 = sadd.s32 %s207, %s208
      %s210 = smul.addr %s209, 8
      %s211 = scalar_lea.vmem %s3, %s210
      %p212 = scmp.lt.s32.totalorder %s18, 1
      %s213 = scalar_select %p212, %s18, 1
      %p214 = scmp.lt.s32.totalorder %s19, 0
      %s215 = scalar_select %p214, %s19, 0
      %s216 = smul.addr %s213, 66
      %s217 = sadd.s32 %s215, %s216
      %s218 = smul.addr %s217, 8
      %s219 = scalar_lea.vmem %s0, %s218
      %p220 = scmp.lt.s32.totalorder %s19, 0
      %s221 = scalar_select %p220, %s19, 0
      %s222 = smul.addr %s221, 7
      %s223 = smul.addr %s222, 8
      %s224 = scalar_lea.vmem %s1, %s223
      %p225 = scmp.lt.s32.totalorder %s19, 0
      %s226 = scalar_select %p225, %s19, 0
      %s227 = scalar_lea.vmem %s2, %s226
      %p228 = scmp.lt.s32.totalorder %s18, 1
      %s229 = scalar_select %p228, %s18, 1
      %p230 = scmp.lt.s32.totalorder %s19, 0
      %s231 = scalar_select %p230, %s19, 0
      %s232 = smul.addr %s229, 32
      %s233 = sadd.s32 %s231, %s232
      %s234 = smul.addr %s233, 8
      %s235 = scalar_lea.vmem %s3, %s234
      %v236 = vld [vmem:[%s227] sm:$0x1]
      %v238 = vlaneseq
      %v239 = vshrl.u32 %v238, 7
      %v240 = vsub.s32 0, %v239
      %v241 = vrot.slane %v236, %v240
      loop: start=0, step=1, limit=16
      $region33: #{_multiscale_dwconv.1} parent=31 // loop_pre_header
        _
      $region34: #{_multiscale_dwconv.1} parent=31 // loop_header
        %s244 = sphi 0, %s248
        %p245 = scmp.ge.s32.totalorder %s244, 16
      $region35: #{_multiscale_dwconv.1} parent=31 // loop_header_branch
        %247 = sbr.rel (%p245) target = $region39
      $region36: #{_multiscale_dwconv.1} parent=31 // loop_body
        %s249 = smul.u32 %s244, 24
        %s250 = scalar_lea.vmem %s219, %s249
        %v251 = vld [vmem:[%s250] sm:$0xff]
        %v252 = vld [vmem:[%s250 + $0x8] sm:$0xff]
        %v253 = vld [vmem:[%s224] sm:$0x1]
        %v254 = vlaneseq
        %v255 = vshrl.u32 %v254, 7
        %v256 = vsub.s32 0, %v255
        %v257 = vrot.slane %v253, %v256
        %v258 = vmul.f32 %v251, %v257
        %v259 = vmul.f32 %v252, %v257
        %v260 = vadd.f32 %v241, %v258
        %v261 = vadd.f32 %v241, %v259
        %v262 = vld [vmem:[%s250 + $0x1] sm:$0xff]
        %v263 = vld [vmem:[%s250 + $0x9] sm:$0xff]
        %v264 = vld [vmem:[%s224 + $0x1] sm:$0x1]
        %v265 = vlaneseq
        %v266 = vshrl.u32 %v265, 7
        %v267 = vsub.s32 0, %v266
        %v268 = vrot.slane %v264, %v267
        %v269 = vmul.f32 %v262, %v268
        %v270 = vmul.f32 %v263, %v268
        %v271 = vadd.f32 %v260, %v269
        %v272 = vadd.f32 %v261, %v270
        %v273 = vld [vmem:[%s250 + $0x2] sm:$0xff]
        %v274 = vld [vmem:[%s250 + $0xa] sm:$0xff]
        %v275 = vld [vmem:[%s224 + $0x2] sm:$0x1]
        %v276 = vlaneseq
        %v277 = vshrl.u32 %v276, 7
        %v278 = vsub.s32 0, %v277
        %v279 = vrot.slane %v275, %v278
        %v280 = vmul.f32 %v273, %v279
        %v281 = vmul.f32 %v274, %v279
        %v282 = vadd.f32 %v271, %v280
        %v283 = vadd.f32 %v272, %v281
        %v284 = vld [vmem:[%s250 + $0x3] sm:$0xff]
        %v285 = vld [vmem:[%s250 + $0xb] sm:$0xff]
        %v286 = vld [vmem:[%s224 + $0x3] sm:$0x1]
        %v287 = vlaneseq
        %v288 = vshrl.u32 %v287, 7
        %v289 = vsub.s32 0, %v288
        %v290 = vrot.slane %v286, %v289
        %v291 = vmul.f32 %v284, %v290
        %v292 = vmul.f32 %v285, %v290
        %v293 = vadd.f32 %v282, %v291
        %v294 = vadd.f32 %v283, %v292
        %v295 = vld [vmem:[%s250 + $0x4] sm:$0xff]
        %v296 = vld [vmem:[%s250 + $0xc] sm:$0xff]
        %v297 = vld [vmem:[%s224 + $0x4] sm:$0x1]
        %v298 = vlaneseq
        %v299 = vshrl.u32 %v298, 7
        %v300 = vsub.s32 0, %v299
        %v301 = vrot.slane %v297, %v300
        %v302 = vmul.f32 %v295, %v301
        %v303 = vmul.f32 %v296, %v301
        %v304 = vadd.f32 %v293, %v302
        %v305 = vadd.f32 %v294, %v303
        %v306 = vld [vmem:[%s250 + $0x5] sm:$0xff]
        %v307 = vld [vmem:[%s250 + $0xd] sm:$0xff]
        %v308 = vld [vmem:[%s224 + $0x5] sm:$0x1]
        %v309 = vlaneseq
        %v310 = vshrl.u32 %v309, 7
        %v311 = vsub.s32 0, %v310
        %v312 = vrot.slane %v308, %v311
        %v313 = vmul.f32 %v306, %v312
        %v314 = vmul.f32 %v307, %v312
        %v315 = vadd.f32 %v304, %v313
        %v316 = vadd.f32 %v305, %v314
        %v317 = vld [vmem:[%s250 + $0x6] sm:$0xff]
        %v318 = vld [vmem:[%s250 + $0xe] sm:$0xff]
        %v319 = vld [vmem:[%s224 + $0x6] sm:$0x1]
        %v320 = vlaneseq
        %v321 = vshrl.u32 %v320, 7
        %v322 = vsub.s32 0, %v321
        %v323 = vrot.slane %v319, %v322
        %v324 = vmul.f32 %v317, %v323
        %v325 = vmul.f32 %v318, %v323
        %v326 = vadd.f32 %v315, %v324
        %v327 = vadd.f32 %v316, %v325
        %s328 = sadd.s32 %s244, 1
        %s329 = smul.u32 %s328, 24
        %s330 = scalar_lea.vmem %s219, %s329
        %v331 = vld [vmem:[%s330] sm:$0xff]
        %v332 = vld [vmem:[%s330 + $0x8] sm:$0xff]
        %s333 = scalar_lea.vmem %s224, 8
        %v334 = vld [vmem:[%s333] sm:$0x1]
        %v335 = vlaneseq
        %v336 = vshrl.u32 %v335, 7
        %v337 = vsub.s32 0, %v336
        %v338 = vrot.slane %v334, %v337
        %v339 = vmul.f32 %v331, %v338
        %v340 = vmul.f32 %v332, %v338
        %v341 = vadd.f32 %v326, %v339
        %v342 = vadd.f32 %v327, %v340
        %v343 = vld [vmem:[%s330 + $0x1] sm:$0xff]
        %v344 = vld [vmem:[%s330 + $0x9] sm:$0xff]
        %v345 = vld [vmem:[%s333 + $0x1] sm:$0x1]
        %v346 = vlaneseq
        %v347 = vshrl.u32 %v346, 7
        %v348 = vsub.s32 0, %v347
        %v349 = vrot.slane %v345, %v348
        %v350 = vmul.f32 %v343, %v349
        %v351 = vmul.f32 %v344, %v349
        %v352 = vadd.f32 %v341, %v350
        %v353 = vadd.f32 %v342, %v351
        %v354 = vld [vmem:[%s330 + $0x2] sm:$0xff]
        %v355 = vld [vmem:[%s330 + $0xa] sm:$0xff]
        %v356 = vld [vmem:[%s333 + $0x2] sm:$0x1]
        %v357 = vlaneseq
        %v358 = vshrl.u32 %v357, 7
        %v359 = vsub.s32 0, %v358
        %v360 = vrot.slane %v356, %v359
        %v361 = vmul.f32 %v354, %v360
        %v362 = vmul.f32 %v355, %v360
        %v363 = vadd.f32 %v352, %v361
        %v364 = vadd.f32 %v353, %v362
        %v365 = vld [vmem:[%s330 + $0x3] sm:$0xff]
        %v366 = vld [vmem:[%s330 + $0xb] sm:$0xff]
        %v367 = vld [vmem:[%s333 + $0x3] sm:$0x1]
        %v368 = vlaneseq
        %v369 = vshrl.u32 %v368, 7
        %v370 = vsub.s32 0, %v369
        %v371 = vrot.slane %v367, %v370
        %v372 = vmul.f32 %v365, %v371
        %v373 = vmul.f32 %v366, %v371
        %v374 = vadd.f32 %v363, %v372
        %v375 = vadd.f32 %v364, %v373
        %v376 = vld [vmem:[%s330 + $0x4] sm:$0xff]
        %v377 = vld [vmem:[%s330 + $0xc] sm:$0xff]
        %v378 = vld [vmem:[%s333 + $0x4] sm:$0x1]
        %v379 = vlaneseq
        %v380 = vshrl.u32 %v379, 7
        %v381 = vsub.s32 0, %v380
        %v382 = vrot.slane %v378, %v381
        %v383 = vmul.f32 %v376, %v382
        %v384 = vmul.f32 %v377, %v382
        %v385 = vadd.f32 %v374, %v383
        %v386 = vadd.f32 %v375, %v384
        %v387 = vld [vmem:[%s330 + $0x5] sm:$0xff]
        %v388 = vld [vmem:[%s330 + $0xd] sm:$0xff]
        %v389 = vld [vmem:[%s333 + $0x5] sm:$0x1]
        %v390 = vlaneseq
        %v391 = vshrl.u32 %v390, 7
        %v392 = vsub.s32 0, %v391
        %v393 = vrot.slane %v389, %v392
        %v394 = vmul.f32 %v387, %v393
        %v395 = vmul.f32 %v388, %v393
        %v396 = vadd.f32 %v385, %v394
        %v397 = vadd.f32 %v386, %v395
        %v398 = vld [vmem:[%s330 + $0x6] sm:$0xff]
        %v399 = vld [vmem:[%s330 + $0xe] sm:$0xff]
        %v400 = vld [vmem:[%s333 + $0x6] sm:$0x1]
        %v401 = vlaneseq
        %v402 = vshrl.u32 %v401, 7
        %v403 = vsub.s32 0, %v402
        %v404 = vrot.slane %v400, %v403
        %v405 = vmul.f32 %v398, %v404
        %v406 = vmul.f32 %v399, %v404
        %v407 = vadd.f32 %v396, %v405
        %v408 = vadd.f32 %v397, %v406
        %s409 = sadd.s32 %s244, 2
        %s410 = smul.u32 %s409, 24
        %s411 = scalar_lea.vmem %s219, %s410
        %v412 = vld [vmem:[%s411] sm:$0xff]
        %v413 = vld [vmem:[%s411 + $0x8] sm:$0xff]
        %s414 = scalar_lea.vmem %s224, 16
        %v415 = vld [vmem:[%s414] sm:$0x1]
        %v416 = vlaneseq
        %v417 = vshrl.u32 %v416, 7
        %v418 = vsub.s32 0, %v417
        %v419 = vrot.slane %v415, %v418
        %v420 = vmul.f32 %v412, %v419
        %v421 = vmul.f32 %v413, %v419
        %v422 = vadd.f32 %v407, %v420
        %v423 = vadd.f32 %v408, %v421
        %v424 = vld [vmem:[%s411 + $0x1] sm:$0xff]
        %v425 = vld [vmem:[%s411 + $0x9] sm:$0xff]
        %v426 = vld [vmem:[%s414 + $0x1] sm:$0x1]
        %v427 = vlaneseq
        %v428 = vshrl.u32 %v427, 7
        %v429 = vsub.s32 0, %v428
        %v430 = vrot.slane %v426, %v429
        %v431 = vmul.f32 %v424, %v430
        %v432 = vmul.f32 %v425, %v430
        %v433 = vadd.f32 %v422, %v431
        %v434 = vadd.f32 %v423, %v432
        %v435 = vld [vmem:[%s411 + $0x2] sm:$0xff]
        %v436 = vld [vmem:[%s411 + $0xa] sm:$0xff]
        %v437 = vld [vmem:[%s414 + $0x2] sm:$0x1]
        %v438 = vlaneseq
        %v439 = vshrl.u32 %v438, 7
        %v440 = vsub.s32 0, %v439
        %v441 = vrot.slane %v437, %v440
        %v442 = vmul.f32 %v435, %v441
        %v443 = vmul.f32 %v436, %v441
        %v444 = vadd.f32 %v433, %v442
        %v445 = vadd.f32 %v434, %v443
        %v446 = vld [vmem:[%s411 + $0x3] sm:$0xff]
        %v447 = vld [vmem:[%s411 + $0xb] sm:$0xff]
        %v448 = vld [vmem:[%s414 + $0x3] sm:$0x1]
        %v449 = vlaneseq
        %v450 = vshrl.u32 %v449, 7
        %v451 = vsub.s32 0, %v450
        %v452 = vrot.slane %v448, %v451
        %v453 = vmul.f32 %v446, %v452
        %v454 = vmul.f32 %v447, %v452
        %v455 = vadd.f32 %v444, %v453
        %v456 = vadd.f32 %v445, %v454
        %v457 = vld [vmem:[%s411 + $0x4] sm:$0xff]
        %v458 = vld [vmem:[%s411 + $0xc] sm:$0xff]
        %v459 = vld [vmem:[%s414 + $0x4] sm:$0x1]
        %v460 = vlaneseq
        %v461 = vshrl.u32 %v460, 7
        %v462 = vsub.s32 0, %v461
        %v463 = vrot.slane %v459, %v462
        %v464 = vmul.f32 %v457, %v463
        %v465 = vmul.f32 %v458, %v463
        %v466 = vadd.f32 %v455, %v464
        %v467 = vadd.f32 %v456, %v465
        %v468 = vld [vmem:[%s411 + $0x5] sm:$0xff]
        %v469 = vld [vmem:[%s411 + $0xd] sm:$0xff]
        %v470 = vld [vmem:[%s414 + $0x5] sm:$0x1]
        %v471 = vlaneseq
        %v472 = vshrl.u32 %v471, 7
        %v473 = vsub.s32 0, %v472
        %v474 = vrot.slane %v470, %v473
        %v475 = vmul.f32 %v468, %v474
        %v476 = vmul.f32 %v469, %v474
        %v477 = vadd.f32 %v466, %v475
        %v478 = vadd.f32 %v467, %v476
        %v479 = vld [vmem:[%s411 + $0x6] sm:$0xff]
        %v480 = vld [vmem:[%s411 + $0xe] sm:$0xff]
        %v481 = vld [vmem:[%s414 + $0x6] sm:$0x1]
        %v482 = vlaneseq
        %v483 = vshrl.u32 %v482, 7
        %v484 = vsub.s32 0, %v483
        %v485 = vrot.slane %v481, %v484
        %v486 = vmul.f32 %v479, %v485
        %v487 = vmul.f32 %v480, %v485
        %v488 = vadd.f32 %v477, %v486
        %v489 = vadd.f32 %v478, %v487
        %s490 = sadd.s32 %s244, 3
        %s491 = smul.u32 %s490, 24
        %s492 = scalar_lea.vmem %s219, %s491
        %v493 = vld [vmem:[%s492] sm:$0xff]
        %v494 = vld [vmem:[%s492 + $0x8] sm:$0xff]
        %s495 = scalar_lea.vmem %s224, 24
        %v496 = vld [vmem:[%s495] sm:$0x1]
        %v497 = vlaneseq
        %v498 = vshrl.u32 %v497, 7
        %v499 = vsub.s32 0, %v498
        %v500 = vrot.slane %v496, %v499
        %v501 = vmul.f32 %v493, %v500
        %v502 = vmul.f32 %v494, %v500
        %v503 = vadd.f32 %v488, %v501
        %v504 = vadd.f32 %v489, %v502
        %v505 = vld [vmem:[%s492 + $0x1] sm:$0xff]
        %v506 = vld [vmem:[%s492 + $0x9] sm:$0xff]
        %v507 = vld [vmem:[%s495 + $0x1] sm:$0x1]
        %v508 = vlaneseq
        %v509 = vshrl.u32 %v508, 7
        %v510 = vsub.s32 0, %v509
        %v511 = vrot.slane %v507, %v510
        %v512 = vmul.f32 %v505, %v511
        %v513 = vmul.f32 %v506, %v511
        %v514 = vadd.f32 %v503, %v512
        %v515 = vadd.f32 %v504, %v513
        %v516 = vld [vmem:[%s492 + $0x2] sm:$0xff]
        %v517 = vld [vmem:[%s492 + $0xa] sm:$0xff]
        %v518 = vld [vmem:[%s495 + $0x2] sm:$0x1]
        %v519 = vlaneseq
        %v520 = vshrl.u32 %v519, 7
        %v521 = vsub.s32 0, %v520
        %v522 = vrot.slane %v518, %v521
        %v523 = vmul.f32 %v516, %v522
        %v524 = vmul.f32 %v517, %v522
        %v525 = vadd.f32 %v514, %v523
        %v526 = vadd.f32 %v515, %v524
        %v527 = vld [vmem:[%s492 + $0x3] sm:$0xff]
        %v528 = vld [vmem:[%s492 + $0xb] sm:$0xff]
        %v529 = vld [vmem:[%s495 + $0x3] sm:$0x1]
        %v530 = vlaneseq
        %v531 = vshrl.u32 %v530, 7
        %v532 = vsub.s32 0, %v531
        %v533 = vrot.slane %v529, %v532
        %v534 = vmul.f32 %v527, %v533
        %v535 = vmul.f32 %v528, %v533
        %v536 = vadd.f32 %v525, %v534
        %v537 = vadd.f32 %v526, %v535
        %v538 = vld [vmem:[%s492 + $0x4] sm:$0xff]
        %v539 = vld [vmem:[%s492 + $0xc] sm:$0xff]
        %v540 = vld [vmem:[%s495 + $0x4] sm:$0x1]
        %v541 = vlaneseq
        %v542 = vshrl.u32 %v541, 7
        %v543 = vsub.s32 0, %v542
        %v544 = vrot.slane %v540, %v543
        %v545 = vmul.f32 %v538, %v544
        %v546 = vmul.f32 %v539, %v544
        %v547 = vadd.f32 %v536, %v545
        %v548 = vadd.f32 %v537, %v546
        %v549 = vld [vmem:[%s492 + $0x5] sm:$0xff]
        %v550 = vld [vmem:[%s492 + $0xd] sm:$0xff]
        %v551 = vld [vmem:[%s495 + $0x5] sm:$0x1]
        %v552 = vlaneseq
        %v553 = vshrl.u32 %v552, 7
        %v554 = vsub.s32 0, %v553
        %v555 = vrot.slane %v551, %v554
        %v556 = vmul.f32 %v549, %v555
        %v557 = vmul.f32 %v550, %v555
        %v558 = vadd.f32 %v547, %v556
        %v559 = vadd.f32 %v548, %v557
        %v560 = vld [vmem:[%s492 + $0x6] sm:$0xff]
        %v561 = vld [vmem:[%s492 + $0xe] sm:$0xff]
        %v562 = vld [vmem:[%s495 + $0x6] sm:$0x1]
        %v563 = vlaneseq
        %v564 = vshrl.u32 %v563, 7
        %v565 = vsub.s32 0, %v564
        %v566 = vrot.slane %v562, %v565
        %v567 = vmul.f32 %v560, %v566
        %v568 = vmul.f32 %v561, %v566
        %v569 = vadd.f32 %v558, %v567
        %v570 = vadd.f32 %v559, %v568
        %s571 = sadd.s32 %s244, 4
        %s572 = smul.u32 %s571, 24
        %s573 = scalar_lea.vmem %s219, %s572
        %v574 = vld [vmem:[%s573] sm:$0xff]
        %v575 = vld [vmem:[%s573 + $0x8] sm:$0xff]
        %s576 = scalar_lea.vmem %s224, 32
        %v577 = vld [vmem:[%s576] sm:$0x1]
        %v578 = vlaneseq
        %v579 = vshrl.u32 %v578, 7
        %v580 = vsub.s32 0, %v579
        %v581 = vrot.slane %v577, %v580
        %v582 = vmul.f32 %v574, %v581
        %v583 = vmul.f32 %v575, %v581
        %v584 = vadd.f32 %v569, %v582
        %v585 = vadd.f32 %v570, %v583
        %v586 = vld [vmem:[%s573 + $0x1] sm:$0xff]
        %v587 = vld [vmem:[%s573 + $0x9] sm:$0xff]
        %v588 = vld [vmem:[%s576 + $0x1] sm:$0x1]
        %v589 = vlaneseq
        %v590 = vshrl.u32 %v589, 7
        %v591 = vsub.s32 0, %v590
        %v592 = vrot.slane %v588, %v591
        %v593 = vmul.f32 %v586, %v592
        %v594 = vmul.f32 %v587, %v592
        %v595 = vadd.f32 %v584, %v593
        %v596 = vadd.f32 %v585, %v594
        %v597 = vld [vmem:[%s573 + $0x2] sm:$0xff]
        %v598 = vld [vmem:[%s573 + $0xa] sm:$0xff]
        %v599 = vld [vmem:[%s576 + $0x2] sm:$0x1]
        %v600 = vlaneseq
        %v601 = vshrl.u32 %v600, 7
        %v602 = vsub.s32 0, %v601
        %v603 = vrot.slane %v599, %v602
        %v604 = vmul.f32 %v597, %v603
        %v605 = vmul.f32 %v598, %v603
        %v606 = vadd.f32 %v595, %v604
        %v607 = vadd.f32 %v596, %v605
        %v608 = vld [vmem:[%s573 + $0x3] sm:$0xff]
        %v609 = vld [vmem:[%s573 + $0xb] sm:$0xff]
        %v610 = vld [vmem:[%s576 + $0x3] sm:$0x1]
        %v611 = vlaneseq
        %v612 = vshrl.u32 %v611, 7
        %v613 = vsub.s32 0, %v612
        %v614 = vrot.slane %v610, %v613
        %v615 = vmul.f32 %v608, %v614
        %v616 = vmul.f32 %v609, %v614
        %v617 = vadd.f32 %v606, %v615
        %v618 = vadd.f32 %v607, %v616
        %v619 = vld [vmem:[%s573 + $0x4] sm:$0xff]
        %v620 = vld [vmem:[%s573 + $0xc] sm:$0xff]
        %v621 = vld [vmem:[%s576 + $0x4] sm:$0x1]
        %v622 = vlaneseq
        %v623 = vshrl.u32 %v622, 7
        %v624 = vsub.s32 0, %v623
        %v625 = vrot.slane %v621, %v624
        %v626 = vmul.f32 %v619, %v625
        %v627 = vmul.f32 %v620, %v625
        %v628 = vadd.f32 %v617, %v626
        %v629 = vadd.f32 %v618, %v627
        %v630 = vld [vmem:[%s573 + $0x5] sm:$0xff]
        %v631 = vld [vmem:[%s573 + $0xd] sm:$0xff]
        %v632 = vld [vmem:[%s576 + $0x5] sm:$0x1]
        %v633 = vlaneseq
        %v634 = vshrl.u32 %v633, 7
        %v635 = vsub.s32 0, %v634
        %v636 = vrot.slane %v632, %v635
        %v637 = vmul.f32 %v630, %v636
        %v638 = vmul.f32 %v631, %v636
        %v639 = vadd.f32 %v628, %v637
        %v640 = vadd.f32 %v629, %v638
        %v641 = vld [vmem:[%s573 + $0x6] sm:$0xff]
        %v642 = vld [vmem:[%s573 + $0xe] sm:$0xff]
        %v643 = vld [vmem:[%s576 + $0x6] sm:$0x1]
        %v644 = vlaneseq
        %v645 = vshrl.u32 %v644, 7
        %v646 = vsub.s32 0, %v645
        %v647 = vrot.slane %v643, %v646
        %v648 = vmul.f32 %v641, %v647
        %v649 = vmul.f32 %v642, %v647
        %v650 = vadd.f32 %v639, %v648
        %v651 = vadd.f32 %v640, %v649
        %s652 = sadd.s32 %s244, 5
        %s653 = smul.u32 %s652, 24
        %s654 = scalar_lea.vmem %s219, %s653
        %v655 = vld [vmem:[%s654] sm:$0xff]
        %v656 = vld [vmem:[%s654 + $0x8] sm:$0xff]
        %s657 = scalar_lea.vmem %s224, 40
        %v658 = vld [vmem:[%s657] sm:$0x1]
        %v659 = vlaneseq
        %v660 = vshrl.u32 %v659, 7
        %v661 = vsub.s32 0, %v660
        %v662 = vrot.slane %v658, %v661
        %v663 = vmul.f32 %v655, %v662
        %v664 = vmul.f32 %v656, %v662
        %v665 = vadd.f32 %v650, %v663
        %v666 = vadd.f32 %v651, %v664
        %v667 = vld [vmem:[%s654 + $0x1] sm:$0xff]
        %v668 = vld [vmem:[%s654 + $0x9] sm:$0xff]
        %v669 = vld [vmem:[%s657 + $0x1] sm:$0x1]
        %v670 = vlaneseq
        %v671 = vshrl.u32 %v670, 7
        %v672 = vsub.s32 0, %v671
        %v673 = vrot.slane %v669, %v672
        %v674 = vmul.f32 %v667, %v673
        %v675 = vmul.f32 %v668, %v673
        %v676 = vadd.f32 %v665, %v674
        %v677 = vadd.f32 %v666, %v675
        %v678 = vld [vmem:[%s654 + $0x2] sm:$0xff]
        %v679 = vld [vmem:[%s654 + $0xa] sm:$0xff]
        %v680 = vld [vmem:[%s657 + $0x2] sm:$0x1]
        %v681 = vlaneseq
        %v682 = vshrl.u32 %v681, 7
        %v683 = vsub.s32 0, %v682
        %v684 = vrot.slane %v680, %v683
        %v685 = vmul.f32 %v678, %v684
        %v686 = vmul.f32 %v679, %v684
        %v687 = vadd.f32 %v676, %v685
        %v688 = vadd.f32 %v677, %v686
        %v689 = vld [vmem:[%s654 + $0x3] sm:$0xff]
        %v690 = vld [vmem:[%s654 + $0xb] sm:$0xff]
        %v691 = vld [vmem:[%s657 + $0x3] sm:$0x1]
        %v692 = vlaneseq
        %v693 = vshrl.u32 %v692, 7
        %v694 = vsub.s32 0, %v693
        %v695 = vrot.slane %v691, %v694
        %v696 = vmul.f32 %v689, %v695
        %v697 = vmul.f32 %v690, %v695
        %v698 = vadd.f32 %v687, %v696
        %v699 = vadd.f32 %v688, %v697
        %v700 = vld [vmem:[%s654 + $0x4] sm:$0xff]
        %v701 = vld [vmem:[%s654 + $0xc] sm:$0xff]
        %v702 = vld [vmem:[%s657 + $0x4] sm:$0x1]
        %v703 = vlaneseq
        %v704 = vshrl.u32 %v703, 7
        %v705 = vsub.s32 0, %v704
        %v706 = vrot.slane %v702, %v705
        %v707 = vmul.f32 %v700, %v706
        %v708 = vmul.f32 %v701, %v706
        %v709 = vadd.f32 %v698, %v707
        %v710 = vadd.f32 %v699, %v708
        %v711 = vld [vmem:[%s654 + $0x5] sm:$0xff]
        %v712 = vld [vmem:[%s654 + $0xd] sm:$0xff]
        %v713 = vld [vmem:[%s657 + $0x5] sm:$0x1]
        %v714 = vlaneseq
        %v715 = vshrl.u32 %v714, 7
        %v716 = vsub.s32 0, %v715
        %v717 = vrot.slane %v713, %v716
        %v718 = vmul.f32 %v711, %v717
        %v719 = vmul.f32 %v712, %v717
        %v720 = vadd.f32 %v709, %v718
        %v721 = vadd.f32 %v710, %v719
        %v722 = vld [vmem:[%s654 + $0x6] sm:$0xff]
        %v723 = vld [vmem:[%s654 + $0xe] sm:$0xff]
        %v724 = vld [vmem:[%s657 + $0x6] sm:$0x1]
        %v725 = vlaneseq
        %v726 = vshrl.u32 %v725, 7
        %v727 = vsub.s32 0, %v726
        %v728 = vrot.slane %v724, %v727
        %v729 = vmul.f32 %v722, %v728
        %v730 = vmul.f32 %v723, %v728
        %v731 = vadd.f32 %v720, %v729
        %v732 = vadd.f32 %v721, %v730
        %s733 = sadd.s32 %s244, 6
        %s734 = smul.u32 %s733, 24
        %s735 = scalar_lea.vmem %s219, %s734
        %v736 = vld [vmem:[%s735] sm:$0xff]
        %v737 = vld [vmem:[%s735 + $0x8] sm:$0xff]
        %s738 = scalar_lea.vmem %s224, 48
        %v739 = vld [vmem:[%s738] sm:$0x1]
        %v740 = vlaneseq
        %v741 = vshrl.u32 %v740, 7
        %v742 = vsub.s32 0, %v741
        %v743 = vrot.slane %v739, %v742
        %v744 = vmul.f32 %v736, %v743
        %v745 = vmul.f32 %v737, %v743
        %v746 = vadd.f32 %v731, %v744
        %v747 = vadd.f32 %v732, %v745
        %v748 = vld [vmem:[%s735 + $0x1] sm:$0xff]
        %v749 = vld [vmem:[%s735 + $0x9] sm:$0xff]
        %v750 = vld [vmem:[%s738 + $0x1] sm:$0x1]
        %v751 = vlaneseq
        %v752 = vshrl.u32 %v751, 7
        %v753 = vsub.s32 0, %v752
        %v754 = vrot.slane %v750, %v753
        %v755 = vmul.f32 %v748, %v754
        %v756 = vmul.f32 %v749, %v754
        %v757 = vadd.f32 %v746, %v755
        %v758 = vadd.f32 %v747, %v756
        %v759 = vld [vmem:[%s735 + $0x2] sm:$0xff]
        %v760 = vld [vmem:[%s735 + $0xa] sm:$0xff]
        %v761 = vld [vmem:[%s738 + $0x2] sm:$0x1]
        %v762 = vlaneseq
        %v763 = vshrl.u32 %v762, 7
        %v764 = vsub.s32 0, %v763
        %v765 = vrot.slane %v761, %v764
        %v766 = vmul.f32 %v759, %v765
        %v767 = vmul.f32 %v760, %v765
        %v768 = vadd.f32 %v757, %v766
        %v769 = vadd.f32 %v758, %v767
        %v770 = vld [vmem:[%s735 + $0x3] sm:$0xff]
        %v771 = vld [vmem:[%s735 + $0xb] sm:$0xff]
        %v772 = vld [vmem:[%s738 + $0x3] sm:$0x1]
        %v773 = vlaneseq
        %v774 = vshrl.u32 %v773, 7
        %v775 = vsub.s32 0, %v774
        %v776 = vrot.slane %v772, %v775
        %v777 = vmul.f32 %v770, %v776
        %v778 = vmul.f32 %v771, %v776
        %v779 = vadd.f32 %v768, %v777
        %v780 = vadd.f32 %v769, %v778
        %v781 = vld [vmem:[%s735 + $0x4] sm:$0xff]
        %v782 = vld [vmem:[%s735 + $0xc] sm:$0xff]
        %v783 = vld [vmem:[%s738 + $0x4] sm:$0x1]
        %v784 = vlaneseq
        %v785 = vshrl.u32 %v784, 7
        %v786 = vsub.s32 0, %v785
        %v787 = vrot.slane %v783, %v786
        %v788 = vmul.f32 %v781, %v787
        %v789 = vmul.f32 %v782, %v787
        %v790 = vadd.f32 %v779, %v788
        %v791 = vadd.f32 %v780, %v789
        %v792 = vld [vmem:[%s735 + $0x5] sm:$0xff]
        %v793 = vld [vmem:[%s735 + $0xd] sm:$0xff]
        %v794 = vld [vmem:[%s738 + $0x5] sm:$0x1]
        %v795 = vlaneseq
        %v796 = vshrl.u32 %v795, 7
        %v797 = vsub.s32 0, %v796
        %v798 = vrot.slane %v794, %v797
        %v799 = vmul.f32 %v792, %v798
        %v800 = vmul.f32 %v793, %v798
        %v801 = vadd.f32 %v790, %v799
        %v802 = vadd.f32 %v791, %v800
        %v803 = vld [vmem:[%s735 + $0x6] sm:$0xff]
        %v804 = vld [vmem:[%s735 + $0xe] sm:$0xff]
        %v805 = vld [vmem:[%s738 + $0x6] sm:$0x1]
        %v806 = vlaneseq
        %v807 = vshrl.u32 %v806, 7
        %v808 = vsub.s32 0, %v807
        %v809 = vrot.slane %v805, %v808
        %v810 = vmul.f32 %v803, %v809
        %v811 = vmul.f32 %v804, %v809
        %v812 = vadd.f32 %v801, %v810
        %v813 = vadd.f32 %v802, %v811
        %s814 = smul.u32 %s244, 16
        %s815 = scalar_lea.vmem %s235, %s814
        %vm816 = vcmask 31744
        %817 = vst.msk [vmem:[%s815] sm:$0xff] %vm816, %v812
        %818 = vst.msk [vmem:[%s815 + $0x8] sm:$0xff] %vm816, %v813
      $region37: #{_multiscale_dwconv.1} parent=31 // loop_footer
        %s248 = sadd.s32 1, %s244
      $region38: #{_multiscale_dwconv.1} parent=31 // loop_footer_branch
        %243 = sbr.rel target = $region34
      $region39: #{_multiscale_dwconv.1} parent=31 // loop_exit
        _
      %p819 = scmp.lt.s32.totalorder %s18, 1
      %s820 = scalar_select %p819, %s18, 1
      %p821 = scmp.lt.s32.totalorder %s19, 0
      %s822 = scalar_select %p821, %s19, 0
      %s823 = smul.addr %s820, 32
      %s824 = sadd.s32 %s822, %s823
      %s825 = smul.addr %s824, 8
      %s826 = scalar_lea.vmem %s3, %s825
      // Predicated region
      $region40: #{_multiscale_dwconv.1} parent=31 // pred_check
        %p827 = pneg %p126
      $region41: #{_multiscale_dwconv.1} parent=31 // pred_check_branch
        %829 = sbr.rel (%p827) target = $region43
      $region42: #{_multiscale_dwconv.1} parent=31 // pred_region
        _
      $region43: #{_multiscale_dwconv.1} parent=31 // pred_fallthru
        _
    $region32: #{_multiscale_dwconv.1} parent=5 // pred_fallthru
      _
    %p830 = scmp.le.s32.totalorder 2, %s9
    // Predicated region
    $region44: #{_multiscale_dwconv.1} parent=5 // pred_check
      %p831 = pneg %p830
    $region45: #{_multiscale_dwconv.1} parent=5 // pred_check_branch
      %833 = sbr.rel (%p831) target = $region47
    $region46: #{_multiscale_dwconv.1} parent=5 // pred_region
      %s834 = ssub.s32 %s9, 2
      // Predicated region
      $region48: #{_multiscale_dwconv.1} parent=46 // pred_check
        %p835 = pneg %p132
      $region49: #{_multiscale_dwconv.1} parent=46 // pred_check_branch
        %837 = sbr.rel (%p835) target = $region51
      $region50: #{_multiscale_dwconv.1} parent=46 // pred_region
        %p838 = scmp.lt.s32.totalorder %s20, 1
        %s839 = scalar_select %p838, %s20, 1
        %p840 = scmp.lt.s32.totalorder %s21, 0
        %s841 = scalar_select %p840, %s21, 0
        %s842 = smul.addr %s839, 32
        %s843 = sadd.s32 %s841, %s842
        %s844 = smul.addr %s843, 8
        %s845 = scalar_lea.vmem %s3, %s844
      $region51: #{_multiscale_dwconv.1} parent=46 // pred_fallthru
        _
    $region47: #{_multiscale_dwconv.1} parent=5 // pred_fallthru
      _
  $region6: #{_multiscale_dwconv.1} parent=0 // loop_footer
    %s13 = sadd.s32 1, %s9
  $region7: #{_multiscale_dwconv.1} parent=0 // loop_footer_branch
    %8 = sbr.rel target = $region3
  $region8: #{_multiscale_dwconv.1} parent=0 // loop_exit
    _

</llo_original>
